<compile_context>
chip_gen: v7x
topology: tpu7x:2x2x1
jax: 0.10.0
libtpu: 0.0.40
codegen_flags: <defaults>
</compile_context>

<pallas_src>
import functools
import math

import jax
import jax.numpy as jnp
from jax.experimental import pallas as pl
from jax.experimental.pallas import tpu as pltpu

D_MODEL = 32
N_HEADS = 4
D_FF = 64
EPS = 1e-6   # LayerNorm eps (added to the *std*, matching the torch module)


# ------------------------------ kernel math --------------------------------

def _layer_norm(x, a, b):
    # kvacc LayerNorm: unbiased std, eps added to the std (NOT inside the var)
    d = x.shape[-1]
    mean = jnp.mean(x, axis=-1, keepdims=True)
    xc = x - mean
    std = jnp.sqrt(jnp.sum(xc * xc, axis=-1, keepdims=True) / (d - 1))
    return a * xc / (std + EPS) + b


def _erf(z):
    # Abramowitz & Stegun 7.1.26 rational approximation (|err| < 1.5e-7).
    # Evaluated fully in-kernel so we never depend on an erf lowering rule
    # in a particular Mosaic build (no try/except fallback path).
    a1, a2, a3, a4, a5 = (0.254829592, -0.284496736, 1.421413741,
                          -1.453152027, 1.061405429)
    p = 0.3275911
    sign = jnp.where(z >= 0.0, 1.0, -1.0)
    az = jnp.abs(z)
    t = 1.0 / (1.0 + p * az)
    poly = ((((a5 * t + a4) * t + a3) * t + a2) * t + a1) * t
    return sign * (1.0 - poly * jnp.exp(-az * az))


def _gelu(y):
    # exact (erf-based) GELU, matching F.gelu's default
    return 0.5 * y * (1.0 + _erf(y * (1.0 / math.sqrt(2.0))))


def _encoder_layer_kernel(n_heads,
                          x_ref, mask_ref,
                          ln1a_ref, ln1b_ref, wqkv_ref, bqkv_ref,
                          wo_ref, bo_ref,
                          ln2a_ref, ln2b_ref, w1_ref, b1_ref, w2_ref, b2_ref,
                          o_ref):
    x = x_ref[...].astype(jnp.float32)            # (S, D)
    mask = mask_ref[...]                          # (S, S), shared by all heads
    S, D = x.shape
    dk = D // n_heads
    scale = 1.0 / math.sqrt(dk)

    # ---- input sublayer: x + out_proj(attn(norm(x))) -----------------------
    xn = _layer_norm(x, ln1a_ref[...], ln1b_ref[...])
    qkv = jnp.dot(xn, wqkv_ref[...],
                  preferred_element_type=jnp.float32) + bqkv_ref[...]   # (S, 3D)

    wo = wo_ref[...]                              # (D, D)
    # Output projection accumulated head-by-head: avoids any in-kernel concat
    # and any HBM-level head transposes.
    proj = jnp.zeros((S, D), jnp.float32) + bo_ref[...]
    qk_dims = (((1,), (1,)), ((), ()))            # q @ k^T without explicit .T
    for h in range(n_heads):                      # static unrolled loop, H=4
        qh = qkv[:, h * dk:(h + 1) * dk]
        kh = qkv[:, D + h * dk:D + (h + 1) * dk]
        vh = qkv[:, 2 * D + h * dk:2 * D + (h + 1) * dk]
        s = jax.lax.dot_general(qh, kh, qk_dims,
                                preferred_element_type=jnp.float32) * scale
        s = jnp.where(mask == 0, -1e9, s)
        s = s - jnp.max(s, axis=-1, keepdims=True)
        p = jnp.exp(s)
        p = p * pl.reciprocal(jnp.sum(p, axis=-1, keepdims=True), approx=True)
        oh = jnp.dot(p, vh, preferred_element_type=jnp.float32)        # (S, dk)
        proj += jnp.dot(oh, wo[h * dk:(h + 1) * dk, :],
                        preferred_element_type=jnp.float32)
    x1 = x + proj

    # ---- output sublayer: x + w2(gelu(w1(norm(x)))) -------------------------
    xn2 = _layer_norm(x1, ln2a_ref[...], ln2b_ref[...])
    hid = jnp.dot(xn2, w1_ref[...],
                  preferred_element_type=jnp.float32) + b1_ref[...]
    hid = _gelu(hid)
    out = x1 + jnp.dot(hid, w2_ref[...],
                       preferred_element_type=jnp.float32) + b2_ref[...]

    # final dropout = identity (eval mode)
    o_ref[...] = out.astype(o_ref.dtype)


# -------------------------------- wrapper -----------------------------------

def transformer_encoder_layer(x, mask, p):
    """Forward pass of TransformerEncoderLayer (dropout = identity / eval)."""
    B, S, D = x.shape
    H = p["n_heads"]
    d_ff = p["w1"].shape[1]

    weight_args = (p["ln1_a"], p["ln1_b"], p["wqkv"], p["bqkv"],
                   p["wo"], p["bo"], p["ln2_a"], p["ln2_b"],
                   p["w1"], p["b1"], p["w2"], p["b2"])

    def rep(shape):
        # full-array block, replicated across the batch grid axis
        return pl.BlockSpec(shape, lambda b: (0,) * len(shape))

    in_specs = [pl.BlockSpec((None, S, D), lambda b: (b, 0, 0)),
                pl.BlockSpec((None, None, S, S), lambda b: (b, 0, 0, 0))]
    in_specs += [rep(tuple(w.shape)) for w in weight_args]

    flops = int(B * (2 * S * D * 3 * D                    # fused QKV matmul
                     + H * (4 * S * S * (D // H))         # QK^T and P@V
                     + 2 * S * D * D                      # output projection
                     + 4 * S * D * d_ff))                 # FFN (two matmuls)
    transcendentals = int(B * (H * S * S + H * S + S * d_ff))
    bytes_accessed = int(sum(a.size * a.dtype.itemsize
                             for a in (x, mask) + weight_args)
                         + x.size * x.dtype.itemsize)

    return pl.pallas_call(
        functools.partial(_encoder_layer_kernel, H),
        out_shape=jax.ShapeDtypeStruct((B, S, D), x.dtype),
        grid=(B,),
        in_specs=in_specs,
        out_specs=pl.BlockSpec((None, S, D), lambda b: (b, 0, 0)),
        compiler_params=pltpu.CompilerParams(
            dimension_semantics=("parallel",)),
        cost_estimate=pl.CostEstimate(flops=flops,
                                      transcendentals=transcendentals,
                                      bytes_accessed=bytes_accessed),
    )(x, mask, *weight_args)


# --------------------------- params / reference ----------------------------

def init_params(key, d_model, n_heads, d_ff):
    keys = jax.random.split(key, 6)

    def lin(k, din, dout):
        k1, k2 = jax.random.split(k)
        bound = 1.0 / math.sqrt(din)
        w = jax.random.uniform(k1, (din, dout), jnp.float32, -bound, bound)
        b = jax.random.uniform(k2, (1, dout), jnp.float32, -bound, bound)
        return w, b

    wq, bq = lin(keys[0], d_model, d_model)
    wk, bk = lin(keys[1], d_model, d_model)
    wv, bv = lin(keys[2], d_model, d_model)
    wo, bo = lin(keys[3], d_model, d_model)
    w1, b1 = lin(keys[4], d_model, d_ff)
    w2, b2 = lin(keys[5], d_ff, d_model)
    return dict(
        n_heads=n_heads,
        wqkv=jnp.concatenate([wq, wk, wv], axis=1),   # fused (D, 3D)
        bqkv=jnp.concatenate([bq, bk, bv], axis=1),   # fused (1, 3D)
        wo=wo, bo=bo, w1=w1, b1=b1, w2=w2, b2=b2,
        ln1_a=jnp.ones((1, d_model), jnp.float32),
        ln1_b=jnp.zeros((1, d_model), jnp.float32),
        ln2_a=jnp.ones((1, d_model), jnp.float32),
        ln2_b=jnp.zeros((1, d_model), jnp.float32),
    )


def ref_forward(x, mask, p):
    B, S, D = x.shape
    H = p["n_heads"]
    dk = D // H

    def ln(t, a, b):
        m = t.mean(-1, keepdims=True)
        c = t - m
        std = jnp.sqrt((c * c).sum(-1, keepdims=True) / (t.shape[-1] - 1))
        return a.reshape(-1) * c / (std + EPS) + b.reshape(-1)

    def linear(t, w, b):
        return t @ w + b.reshape(-1)

    xn = ln(x, p["ln1_a"], p["ln1_b"])
    qkv = linear(xn, p["wqkv"], p["bqkv"])
    q, k, v = jnp.split(qkv, 3, axis=-1)
    q = q.reshape(B, S, H, dk).transpose(0, 2, 1, 3)
    k = k.reshape(B, S, H, dk).transpose(0, 2, 1, 3)
    v = v.reshape(B, S, H, dk).transpose(0, 2, 1, 3)
    s = q @ jnp.swapaxes(k, -2, -1) / math.sqrt(dk)
    s = jnp.where(mask == 0, -1e9, s)
    pa = jax.nn.softmax(s, axis=-1)
    a = (pa @ v).transpose(0, 2, 1, 3).reshape(B, S, D)
    x1 = x + linear(a, p["wo"], p["bo"])
    xn2 = ln(x1, p["ln2_a"], p["ln2_b"])
    h = linear(xn2, p["w1"], p["b1"])
    h = 0.5 * h * (1.0 + jax.lax.erf(h / math.sqrt(2.0)))
    return x1 + linear(h, p["w2"], p["b2"])


if __name__ == "__main__":
    key = jax.random.PRNGKey(0)
    kx, km, kp = jax.random.split(key, 3)
    B, S = 2, 8
    x = jax.random.normal(kx, (B, S, D_MODEL), jnp.float32)
    # mask: 1 = attend, 0 = masked; broadcast over heads like the torch module
    mask = (jax.random.uniform(km, (B, 1, S, S)) > 0.2).astype(jnp.int32)
    params = init_params(kp, D_MODEL, N_HEADS, D_FF)

    out = transformer_encoder_layer(x, mask, params)
    out = jax.block_until_ready(out)

    ref = ref_forward(x, mask, params)
    assert out.shape == (B, S, D_MODEL)
    err = float(jnp.max(jnp.abs(out - ref)))
    assert jnp.allclose(out, ref, atol=2e-3, rtol=2e-3), f"max abs err {err}"
    print("KERNEL_OK")
</pallas_src>

<mosaic_0001>
module attributes {stable_mosaic.version = 11 : i64} {
  func.func @_encoder_layer_kernel(%arg0: i32, %arg1: memref<1x8x32xf32, #tpu.memory_space<vmem>>, %arg2: memref<1x1x8x8xi32, #tpu.memory_space<vmem>>, %arg3: memref<1x32xf32, #tpu.memory_space<vmem>>, %arg4: memref<1x32xf32, #tpu.memory_space<vmem>>, %arg5: memref<32x96xf32, #tpu.memory_space<vmem>>, %arg6: memref<1x96xf32, #tpu.memory_space<vmem>>, %arg7: memref<32x32xf32, #tpu.memory_space<vmem>>, %arg8: memref<1x32xf32, #tpu.memory_space<vmem>>, %arg9: memref<1x32xf32, #tpu.memory_space<vmem>>, %arg10: memref<1x32xf32, #tpu.memory_space<vmem>>, %arg11: memref<32x64xf32, #tpu.memory_space<vmem>>, %arg12: memref<1x64xf32, #tpu.memory_space<vmem>>, %arg13: memref<64x32xf32, #tpu.memory_space<vmem>>, %arg14: memref<1x32xf32, #tpu.memory_space<vmem>>, %arg15: memref<1x8x32xf32, #tpu.memory_space<vmem>>) attributes {dimension_semantics = [#tpu.dimension_semantics<parallel>], iteration_bounds = array<i64: 2>, scalar_prefetch = 0 : i64, scratch_operands = 0 : i64, tpu.core_type = #tpu.core_type<tc>, window_params = [{transform_indices = @transform_0, window_bounds = array<i64: 1, 8, 32>}, {transform_indices = @transform_1, window_bounds = array<i64: 1, 1, 8, 8>}, {pipeline_mode = #tpu.pipeline_mode<synchronous>, transform_indices = @transform_2, window_bounds = array<i64: 1, 32>}, {pipeline_mode = #tpu.pipeline_mode<synchronous>, transform_indices = @transform_3, window_bounds = array<i64: 1, 32>}, {pipeline_mode = #tpu.pipeline_mode<synchronous>, transform_indices = @transform_4, window_bounds = array<i64: 32, 96>}, {pipeline_mode = #tpu.pipeline_mode<synchronous>, transform_indices = @transform_5, window_bounds = array<i64: 1, 96>}, {pipeline_mode = #tpu.pipeline_mode<synchronous>, transform_indices = @transform_6, window_bounds = array<i64: 32, 32>}, {pipeline_mode = #tpu.pipeline_mode<synchronous>, transform_indices = @transform_7, window_bounds = array<i64: 1, 32>}, {pipeline_mode = #tpu.pipeline_mode<synchronous>, transform_indices = @transform_8, window_bounds = array<i64: 1, 32>}, {pipeline_mode = #tpu.pipeline_mode<synchronous>, transform_indices = @transform_9, window_bounds = array<i64: 1, 32>}, {pipeline_mode = #tpu.pipeline_mode<synchronous>, transform_indices = @transform_10, window_bounds = array<i64: 32, 64>}, {pipeline_mode = #tpu.pipeline_mode<synchronous>, transform_indices = @transform_11, window_bounds = array<i64: 1, 64>}, {pipeline_mode = #tpu.pipeline_mode<synchronous>, transform_indices = @transform_12, window_bounds = array<i64: 64, 32>}, {pipeline_mode = #tpu.pipeline_mode<synchronous>, transform_indices = @transform_13, window_bounds = array<i64: 1, 32>}, {transform_indices = @transform_14, window_bounds = array<i64: 1, 8, 32>}]} {
    %c0 = arith.constant 0 : index
    %c0_0 = arith.constant 0 : index
    %c0_1 = arith.constant 0 : index
    %0 = vector.load %arg1[%c0, %c0_0, %c0_1] : memref<1x8x32xf32, #tpu.memory_space<vmem>>, vector<1x8x32xf32>
    %1 = vector.shape_cast %0 : vector<1x8x32xf32> to vector<8x32xf32>
    %c0_2 = arith.constant 0 : index
    %c0_3 = arith.constant 0 : index
    %c0_4 = arith.constant 0 : index
    %c0_5 = arith.constant 0 : index
    %2 = vector.load %arg2[%c0_2, %c0_3, %c0_4, %c0_5] : memref<1x1x8x8xi32, #tpu.memory_space<vmem>>, vector<1x1x8x8xi32>
    %3 = vector.shape_cast %2 : vector<1x1x8x8xi32> to vector<8x8xi32>
    %c0_6 = arith.constant 0 : index
    %c0_7 = arith.constant 0 : index
    %4 = vector.load %arg3[%c0_6, %c0_7] : memref<1x32xf32, #tpu.memory_space<vmem>>, vector<1x32xf32>
    %c0_8 = arith.constant 0 : index
    %c0_9 = arith.constant 0 : index
    %5 = vector.load %arg4[%c0_8, %c0_9] : memref<1x32xf32, #tpu.memory_space<vmem>>, vector<1x32xf32>
    %cst = arith.constant dense<0.000000e+00> : vector<8xf32>
    %6 = vector.multi_reduction <add>, %1, %cst [1] : vector<8x32xf32> to vector<8xf32>
    %7 = vector.shape_cast %6 : vector<8xf32> to vector<8x1xf32>
    %cst_10 = arith.constant 3.200000e+01 : f32
    %8 = vector.broadcast %cst_10 : f32 to vector<8x1xf32>
    %9 = arith.divf %7, %8 : vector<8x1xf32>
    %10 = vector.broadcast %9 : vector<8x1xf32> to vector<8x32xf32>
    %11 = arith.subf %1, %10 : vector<8x32xf32>
    %12 = arith.mulf %11, %11 : vector<8x32xf32>
    %cst_11 = arith.constant dense<0.000000e+00> : vector<8xf32>
    %13 = vector.multi_reduction <add>, %12, %cst_11 [1] : vector<8x32xf32> to vector<8xf32>
    %14 = vector.shape_cast %13 : vector<8xf32> to vector<8x1xf32>
    %cst_12 = arith.constant 3.100000e+01 : f32
    %15 = vector.broadcast %cst_12 : f32 to vector<8x1xf32>
    %16 = arith.divf %14, %15 : vector<8x1xf32>
    %17 = math.sqrt %16 : vector<8x1xf32>
    %18 = vector.broadcast %4 : vector<1x32xf32> to vector<8x32xf32>
    %19 = arith.mulf %18, %11 : vector<8x32xf32>
    %cst_13 = arith.constant 9.99999997E-7 : f32
    %20 = vector.broadcast %cst_13 : f32 to vector<8x1xf32>
    %21 = arith.addf %17, %20 : vector<8x1xf32>
    %22 = vector.broadcast %21 : vector<8x1xf32> to vector<8x32xf32>
    %23 = arith.divf %19, %22 : vector<8x32xf32>
    %24 = vector.broadcast %5 : vector<1x32xf32> to vector<8x32xf32>
    %25 = arith.addf %23, %24 : vector<8x32xf32>
    %c0_14 = arith.constant 0 : index
    %c0_15 = arith.constant 0 : index
    %26 = vector.load %arg5[%c0_14, %c0_15] : memref<32x96xf32, #tpu.memory_space<vmem>>, vector<32x96xf32>
    %cst_16 = arith.constant dense<0.000000e+00> : vector<8x96xf32>
    %27 = tpu.matmul %25, %26, %cst_16 {dimension_numbers = #tpu.dot_dimension_numbers<[1], [0], [0], [1], [0, 0, 1, 1], [], []>} : vector<8x32xf32>, vector<32x96xf32>, vector<8x96xf32> -> vector<8x96xf32>
    %c0_17 = arith.constant 0 : index
    %c0_18 = arith.constant 0 : index
    %28 = vector.load %arg6[%c0_17, %c0_18] : memref<1x96xf32, #tpu.memory_space<vmem>>, vector<1x96xf32>
    %29 = vector.broadcast %28 : vector<1x96xf32> to vector<8x96xf32>
    %30 = arith.addf %27, %29 : vector<8x96xf32>
    %c0_19 = arith.constant 0 : index
    %c0_20 = arith.constant 0 : index
    %31 = vector.load %arg7[%c0_19, %c0_20] : memref<32x32xf32, #tpu.memory_space<vmem>>, vector<32x32xf32>
    %cst_21 = arith.constant 0.000000e+00 : f32
    %32 = vector.broadcast %cst_21 : f32 to vector<8x32xf32>
    %c0_22 = arith.constant 0 : index
    %c0_23 = arith.constant 0 : index
    %33 = vector.load %arg8[%c0_22, %c0_23] : memref<1x32xf32, #tpu.memory_space<vmem>>, vector<1x32xf32>
    %34 = vector.broadcast %33 : vector<1x32xf32> to vector<8x32xf32>
    %35 = arith.addf %32, %34 : vector<8x32xf32>
    %36 = vector.extract_strided_slice %30 {offsets = [0, 0], sizes = [8, 8], strides = [1, 1]} : vector<8x96xf32> to vector<8x8xf32>
    %37 = vector.extract_strided_slice %30 {offsets = [0, 32], sizes = [8, 8], strides = [1, 1]} : vector<8x96xf32> to vector<8x8xf32>
    %38 = vector.extract_strided_slice %30 {offsets = [0, 64], sizes = [8, 8], strides = [1, 1]} : vector<8x96xf32> to vector<8x8xf32>
    %cst_24 = arith.constant dense<0.000000e+00> : vector<8x8xf32>
    %39 = tpu.matmul %36, %37, %cst_24 {dimension_numbers = #tpu.dot_dimension_numbers<[1], [1], [0], [0], [0, 0, 1, 0], [], []>} : vector<8x8xf32>, vector<8x8xf32>, vector<8x8xf32> -> vector<8x8xf32>
    %cst_25 = arith.constant 0.353553385 : f32
    %40 = vector.broadcast %cst_25 : f32 to vector<8x8xf32>
    %41 = arith.mulf %39, %40 : vector<8x8xf32>
    %c0_i32 = arith.constant 0 : i32
    %42 = vector.broadcast %c0_i32 : i32 to vector<8x8xi32>
    %43 = arith.cmpi eq, %3, %42 : vector<8x8xi32>
    %cst_26 = arith.constant -1.000000e+09 : f32
    %44 = vector.broadcast %cst_26 : f32 to vector<8x8xf32>
    %45 = arith.select %43, %44, %41 : vector<8x8xi1>, vector<8x8xf32>
    %cst_27 = arith.constant dense<0xFF800000> : vector<8xf32>
    %46 = vector.multi_reduction <maximumf>, %45, %cst_27 [1] : vector<8x8xf32> to vector<8xf32>
    %47 = vector.shape_cast %46 : vector<8xf32> to vector<8x1xf32>
    %48 = vector.broadcast %47 : vector<8x1xf32> to vector<8x8xf32>
    %49 = arith.subf %45, %48 : vector<8x8xf32>
    %50 = math.exp %49 : vector<8x8xf32>
    %cst_28 = arith.constant dense<0.000000e+00> : vector<8xf32>
    %51 = vector.multi_reduction <add>, %50, %cst_28 [1] : vector<8x8xf32> to vector<8xf32>
    %52 = vector.shape_cast %51 : vector<8xf32> to vector<8x1xf32>
    %53 = tpu.reciprocal %52 {approx = true} : vector<8x1xf32> -> vector<8x1xf32>
    %54 = vector.broadcast %53 : vector<8x1xf32> to vector<8x8xf32>
    %55 = arith.mulf %50, %54 : vector<8x8xf32>
    %cst_29 = arith.constant dense<0.000000e+00> : vector<8x8xf32>
    %56 = tpu.matmul %55, %38, %cst_29 {dimension_numbers = #tpu.dot_dimension_numbers<[1], [0], [0], [1], [0, 0, 1, 1], [], []>} : vector<8x8xf32>, vector<8x8xf32>, vector<8x8xf32> -> vector<8x8xf32>
    %57 = vector.extract_strided_slice %31 {offsets = [0, 0], sizes = [8, 32], strides = [1, 1]} : vector<32x32xf32> to vector<8x32xf32>
    %cst_30 = arith.constant dense<0.000000e+00> : vector<8x32xf32>
    %58 = tpu.matmul %56, %57, %cst_30 {dimension_numbers = #tpu.dot_dimension_numbers<[1], [0], [0], [1], [0, 0, 1, 1], [], []>} : vector<8x8xf32>, vector<8x32xf32>, vector<8x32xf32> -> vector<8x32xf32>
    %59 = arith.addf %35, %58 : vector<8x32xf32>
    %60 = vector.extract_strided_slice %30 {offsets = [0, 8], sizes = [8, 8], strides = [1, 1]} : vector<8x96xf32> to vector<8x8xf32>
    %61 = vector.extract_strided_slice %30 {offsets = [0, 40], sizes = [8, 8], strides = [1, 1]} : vector<8x96xf32> to vector<8x8xf32>
    %62 = vector.extract_strided_slice %30 {offsets = [0, 72], sizes = [8, 8], strides = [1, 1]} : vector<8x96xf32> to vector<8x8xf32>
    %cst_31 = arith.constant dense<0.000000e+00> : vector<8x8xf32>
    %63 = tpu.matmul %60, %61, %cst_31 {dimension_numbers = #tpu.dot_dimension_numbers<[1], [1], [0], [0], [0, 0, 1, 0], [], []>} : vector<8x8xf32>, vector<8x8xf32>, vector<8x8xf32> -> vector<8x8xf32>
    %cst_32 = arith.constant 0.353553385 : f32
    %64 = vector.broadcast %cst_32 : f32 to vector<8x8xf32>
    %65 = arith.mulf %63, %64 : vector<8x8xf32>
    %c0_i32_33 = arith.constant 0 : i32
    %66 = vector.broadcast %c0_i32_33 : i32 to vector<8x8xi32>
    %67 = arith.cmpi eq, %3, %66 : vector<8x8xi32>
    %cst_34 = arith.constant -1.000000e+09 : f32
    %68 = vector.broadcast %cst_34 : f32 to vector<8x8xf32>
    %69 = arith.select %67, %68, %65 : vector<8x8xi1>, vector<8x8xf32>
    %cst_35 = arith.constant dense<0xFF800000> : vector<8xf32>
    %70 = vector.multi_reduction <maximumf>, %69, %cst_35 [1] : vector<8x8xf32> to vector<8xf32>
    %71 = vector.shape_cast %70 : vector<8xf32> to vector<8x1xf32>
    %72 = vector.broadcast %71 : vector<8x1xf32> to vector<8x8xf32>
    %73 = arith.subf %69, %72 : vector<8x8xf32>
    %74 = math.exp %73 : vector<8x8xf32>
    %cst_36 = arith.constant dense<0.000000e+00> : vector<8xf32>
    %75 = vector.multi_reduction <add>, %74, %cst_36 [1] : vector<8x8xf32> to vector<8xf32>
    %76 = vector.shape_cast %75 : vector<8xf32> to vector<8x1xf32>
    %77 = tpu.reciprocal %76 {approx = true} : vector<8x1xf32> -> vector<8x1xf32>
    %78 = vector.broadcast %77 : vector<8x1xf32> to vector<8x8xf32>
    %79 = arith.mulf %74, %78 : vector<8x8xf32>
    %cst_37 = arith.constant dense<0.000000e+00> : vector<8x8xf32>
    %80 = tpu.matmul %79, %62, %cst_37 {dimension_numbers = #tpu.dot_dimension_numbers<[1], [0], [0], [1], [0, 0, 1, 1], [], []>} : vector<8x8xf32>, vector<8x8xf32>, vector<8x8xf32> -> vector<8x8xf32>
    %81 = vector.extract_strided_slice %31 {offsets = [8, 0], sizes = [8, 32], strides = [1, 1]} : vector<32x32xf32> to vector<8x32xf32>
    %cst_38 = arith.constant dense<0.000000e+00> : vector<8x32xf32>
    %82 = tpu.matmul %80, %81, %cst_38 {dimension_numbers = #tpu.dot_dimension_numbers<[1], [0], [0], [1], [0, 0, 1, 1], [], []>} : vector<8x8xf32>, vector<8x32xf32>, vector<8x32xf32> -> vector<8x32xf32>
    %83 = arith.addf %59, %82 : vector<8x32xf32>
    %84 = vector.extract_strided_slice %30 {offsets = [0, 16], sizes = [8, 8], strides = [1, 1]} : vector<8x96xf32> to vector<8x8xf32>
    %85 = vector.extract_strided_slice %30 {offsets = [0, 48], sizes = [8, 8], strides = [1, 1]} : vector<8x96xf32> to vector<8x8xf32>
    %86 = vector.extract_strided_slice %30 {offsets = [0, 80], sizes = [8, 8], strides = [1, 1]} : vector<8x96xf32> to vector<8x8xf32>
    %cst_39 = arith.constant dense<0.000000e+00> : vector<8x8xf32>
    %87 = tpu.matmul %84, %85, %cst_39 {dimension_numbers = #tpu.dot_dimension_numbers<[1], [1], [0], [0], [0, 0, 1, 0], [], []>} : vector<8x8xf32>, vector<8x8xf32>, vector<8x8xf32> -> vector<8x8xf32>
    %cst_40 = arith.constant 0.353553385 : f32
    %88 = vector.broadcast %cst_40 : f32 to vector<8x8xf32>
    %89 = arith.mulf %87, %88 : vector<8x8xf32>
    %c0_i32_41 = arith.constant 0 : i32
    %90 = vector.broadcast %c0_i32_41 : i32 to vector<8x8xi32>
    %91 = arith.cmpi eq, %3, %90 : vector<8x8xi32>
    %cst_42 = arith.constant -1.000000e+09 : f32
    %92 = vector.broadcast %cst_42 : f32 to vector<8x8xf32>
    %93 = arith.select %91, %92, %89 : vector<8x8xi1>, vector<8x8xf32>
    %cst_43 = arith.constant dense<0xFF800000> : vector<8xf32>
    %94 = vector.multi_reduction <maximumf>, %93, %cst_43 [1] : vector<8x8xf32> to vector<8xf32>
    %95 = vector.shape_cast %94 : vector<8xf32> to vector<8x1xf32>
    %96 = vector.broadcast %95 : vector<8x1xf32> to vector<8x8xf32>
    %97 = arith.subf %93, %96 : vector<8x8xf32>
    %98 = math.exp %97 : vector<8x8xf32>
    %cst_44 = arith.constant dense<0.000000e+00> : vector<8xf32>
    %99 = vector.multi_reduction <add>, %98, %cst_44 [1] : vector<8x8xf32> to vector<8xf32>
    %100 = vector.shape_cast %99 : vector<8xf32> to vector<8x1xf32>
    %101 = tpu.reciprocal %100 {approx = true} : vector<8x1xf32> -> vector<8x1xf32>
    %102 = vector.broadcast %101 : vector<8x1xf32> to vector<8x8xf32>
    %103 = arith.mulf %98, %102 : vector<8x8xf32>
    %cst_45 = arith.constant dense<0.000000e+00> : vector<8x8xf32>
    %104 = tpu.matmul %103, %86, %cst_45 {dimension_numbers = #tpu.dot_dimension_numbers<[1], [0], [0], [1], [0, 0, 1, 1], [], []>} : vector<8x8xf32>, vector<8x8xf32>, vector<8x8xf32> -> vector<8x8xf32>
    %105 = vector.extract_strided_slice %31 {offsets = [16, 0], sizes = [8, 32], strides = [1, 1]} : vector<32x32xf32> to vector<8x32xf32>
    %cst_46 = arith.constant dense<0.000000e+00> : vector<8x32xf32>
    %106 = tpu.matmul %104, %105, %cst_46 {dimension_numbers = #tpu.dot_dimension_numbers<[1], [0], [0], [1], [0, 0, 1, 1], [], []>} : vector<8x8xf32>, vector<8x32xf32>, vector<8x32xf32> -> vector<8x32xf32>
    %107 = arith.addf %83, %106 : vector<8x32xf32>
    %108 = vector.extract_strided_slice %30 {offsets = [0, 24], sizes = [8, 8], strides = [1, 1]} : vector<8x96xf32> to vector<8x8xf32>
    %109 = vector.extract_strided_slice %30 {offsets = [0, 56], sizes = [8, 8], strides = [1, 1]} : vector<8x96xf32> to vector<8x8xf32>
    %110 = vector.extract_strided_slice %30 {offsets = [0, 88], sizes = [8, 8], strides = [1, 1]} : vector<8x96xf32> to vector<8x8xf32>
    %cst_47 = arith.constant dense<0.000000e+00> : vector<8x8xf32>
    %111 = tpu.matmul %108, %109, %cst_47 {dimension_numbers = #tpu.dot_dimension_numbers<[1], [1], [0], [0], [0, 0, 1, 0], [], []>} : vector<8x8xf32>, vector<8x8xf32>, vector<8x8xf32> -> vector<8x8xf32>
    %cst_48 = arith.constant 0.353553385 : f32
    %112 = vector.broadcast %cst_48 : f32 to vector<8x8xf32>
    %113 = arith.mulf %111, %112 : vector<8x8xf32>
    %c0_i32_49 = arith.constant 0 : i32
    %114 = vector.broadcast %c0_i32_49 : i32 to vector<8x8xi32>
    %115 = arith.cmpi eq, %3, %114 : vector<8x8xi32>
    %cst_50 = arith.constant -1.000000e+09 : f32
    %116 = vector.broadcast %cst_50 : f32 to vector<8x8xf32>
    %117 = arith.select %115, %116, %113 : vector<8x8xi1>, vector<8x8xf32>
    %cst_51 = arith.constant dense<0xFF800000> : vector<8xf32>
    %118 = vector.multi_reduction <maximumf>, %117, %cst_51 [1] : vector<8x8xf32> to vector<8xf32>
    %119 = vector.shape_cast %118 : vector<8xf32> to vector<8x1xf32>
    %120 = vector.broadcast %119 : vector<8x1xf32> to vector<8x8xf32>
    %121 = arith.subf %117, %120 : vector<8x8xf32>
    %122 = math.exp %121 : vector<8x8xf32>
    %cst_52 = arith.constant dense<0.000000e+00> : vector<8xf32>
    %123 = vector.multi_reduction <add>, %122, %cst_52 [1] : vector<8x8xf32> to vector<8xf32>
    %124 = vector.shape_cast %123 : vector<8xf32> to vector<8x1xf32>
    %125 = tpu.reciprocal %124 {approx = true} : vector<8x1xf32> -> vector<8x1xf32>
    %126 = vector.broadcast %125 : vector<8x1xf32> to vector<8x8xf32>
    %127 = arith.mulf %122, %126 : vector<8x8xf32>
    %cst_53 = arith.constant dense<0.000000e+00> : vector<8x8xf32>
    %128 = tpu.matmul %127, %110, %cst_53 {dimension_numbers = #tpu.dot_dimension_numbers<[1], [0], [0], [1], [0, 0, 1, 1], [], []>} : vector<8x8xf32>, vector<8x8xf32>, vector<8x8xf32> -> vector<8x8xf32>
    %129 = vector.extract_strided_slice %31 {offsets = [24, 0], sizes = [8, 32], strides = [1, 1]} : vector<32x32xf32> to vector<8x32xf32>
    %cst_54 = arith.constant dense<0.000000e+00> : vector<8x32xf32>
    %130 = tpu.matmul %128, %129, %cst_54 {dimension_numbers = #tpu.dot_dimension_numbers<[1], [0], [0], [1], [0, 0, 1, 1], [], []>} : vector<8x8xf32>, vector<8x32xf32>, vector<8x32xf32> -> vector<8x32xf32>
    %131 = arith.addf %107, %130 : vector<8x32xf32>
    %132 = arith.addf %1, %131 : vector<8x32xf32>
    %c0_55 = arith.constant 0 : index
    %c0_56 = arith.constant 0 : index
    %133 = vector.load %arg9[%c0_55, %c0_56] : memref<1x32xf32, #tpu.memory_space<vmem>>, vector<1x32xf32>
    %c0_57 = arith.constant 0 : index
    %c0_58 = arith.constant 0 : index
    %134 = vector.load %arg10[%c0_57, %c0_58] : memref<1x32xf32, #tpu.memory_space<vmem>>, vector<1x32xf32>
    %cst_59 = arith.constant dense<0.000000e+00> : vector<8xf32>
    %135 = vector.multi_reduction <add>, %132, %cst_59 [1] : vector<8x32xf32> to vector<8xf32>
    %136 = vector.shape_cast %135 : vector<8xf32> to vector<8x1xf32>
    %cst_60 = arith.constant 3.200000e+01 : f32
    %137 = vector.broadcast %cst_60 : f32 to vector<8x1xf32>
    %138 = arith.divf %136, %137 : vector<8x1xf32>
    %139 = vector.broadcast %138 : vector<8x1xf32> to vector<8x32xf32>
    %140 = arith.subf %132, %139 : vector<8x32xf32>
    %141 = arith.mulf %140, %140 : vector<8x32xf32>
    %cst_61 = arith.constant dense<0.000000e+00> : vector<8xf32>
    %142 = vector.multi_reduction <add>, %141, %cst_61 [1] : vector<8x32xf32> to vector<8xf32>
    %143 = vector.shape_cast %142 : vector<8xf32> to vector<8x1xf32>
    %cst_62 = arith.constant 3.100000e+01 : f32
    %144 = vector.broadcast %cst_62 : f32 to vector<8x1xf32>
    %145 = arith.divf %143, %144 : vector<8x1xf32>
    %146 = math.sqrt %145 : vector<8x1xf32>
    %147 = vector.broadcast %133 : vector<1x32xf32> to vector<8x32xf32>
    %148 = arith.mulf %147, %140 : vector<8x32xf32>
    %cst_63 = arith.constant 9.99999997E-7 : f32
    %149 = vector.broadcast %cst_63 : f32 to vector<8x1xf32>
    %150 = arith.addf %146, %149 : vector<8x1xf32>
    %151 = vector.broadcast %150 : vector<8x1xf32> to vector<8x32xf32>
    %152 = arith.divf %148, %151 : vector<8x32xf32>
    %153 = vector.broadcast %134 : vector<1x32xf32> to vector<8x32xf32>
    %154 = arith.addf %152, %153 : vector<8x32xf32>
    %c0_64 = arith.constant 0 : index
    %c0_65 = arith.constant 0 : index
    %155 = vector.load %arg11[%c0_64, %c0_65] : memref<32x64xf32, #tpu.memory_space<vmem>>, vector<32x64xf32>
    %cst_66 = arith.constant dense<0.000000e+00> : vector<8x64xf32>
    %156 = tpu.matmul %154, %155, %cst_66 {dimension_numbers = #tpu.dot_dimension_numbers<[1], [0], [0], [1], [0, 0, 1, 1], [], []>} : vector<8x32xf32>, vector<32x64xf32>, vector<8x64xf32> -> vector<8x64xf32>
    %c0_67 = arith.constant 0 : index
    %c0_68 = arith.constant 0 : index
    %157 = vector.load %arg12[%c0_67, %c0_68] : memref<1x64xf32, #tpu.memory_space<vmem>>, vector<1x64xf32>
    %158 = vector.broadcast %157 : vector<1x64xf32> to vector<8x64xf32>
    %159 = arith.addf %156, %158 : vector<8x64xf32>
    %cst_69 = arith.constant 5.000000e-01 : f32
    %160 = vector.broadcast %cst_69 : f32 to vector<8x64xf32>
    %161 = arith.mulf %160, %159 : vector<8x64xf32>
    %cst_70 = arith.constant 0.707106769 : f32
    %162 = vector.broadcast %cst_70 : f32 to vector<8x64xf32>
    %163 = arith.mulf %159, %162 : vector<8x64xf32>
    %cst_71 = arith.constant 0.000000e+00 : f32
    %164 = vector.broadcast %cst_71 : f32 to vector<8x64xf32>
    %165 = arith.cmpf oge, %163, %164 : vector<8x64xf32>
    %cst_72 = arith.constant 1.000000e+00 : f32
    %cst_73 = arith.constant -1.000000e+00 : f32
    %166 = vector.broadcast %cst_72 : f32 to vector<8x64xf32>
    %167 = vector.broadcast %cst_73 : f32 to vector<8x64xf32>
    %168 = arith.select %165, %166, %167 : vector<8x64xi1>, vector<8x64xf32>
    %169 = math.absf %163 : vector<8x64xf32>
    %cst_74 = arith.constant 0.327591091 : f32
    %170 = vector.broadcast %cst_74 : f32 to vector<8x64xf32>
    %171 = arith.mulf %170, %169 : vector<8x64xf32>
    %cst_75 = arith.constant 1.000000e+00 : f32
    %172 = vector.broadcast %cst_75 : f32 to vector<8x64xf32>
    %173 = arith.addf %172, %171 : vector<8x64xf32>
    %cst_76 = arith.constant 1.000000e+00 : f32
    %174 = vector.broadcast %cst_76 : f32 to vector<8x64xf32>
    %175 = arith.divf %174, %173 : vector<8x64xf32>
    %cst_77 = arith.constant 1.06140542 : f32
    %176 = vector.broadcast %cst_77 : f32 to vector<8x64xf32>
    %177 = arith.mulf %176, %175 : vector<8x64xf32>
    %cst_78 = arith.constant -1.45315206 : f32
    %178 = vector.broadcast %cst_78 : f32 to vector<8x64xf32>
    %179 = arith.addf %177, %178 : vector<8x64xf32>
    %180 = arith.mulf %179, %175 : vector<8x64xf32>
    %cst_79 = arith.constant 1.42141378 : f32
    %181 = vector.broadcast %cst_79 : f32 to vector<8x64xf32>
    %182 = arith.addf %180, %181 : vector<8x64xf32>
    %183 = arith.mulf %182, %175 : vector<8x64xf32>
    %cst_80 = arith.constant -0.284496725 : f32
    %184 = vector.broadcast %cst_80 : f32 to vector<8x64xf32>
    %185 = arith.addf %183, %184 : vector<8x64xf32>
    %186 = arith.mulf %185, %175 : vector<8x64xf32>
    %cst_81 = arith.constant 0.254829586 : f32
    %187 = vector.broadcast %cst_81 : f32 to vector<8x64xf32>
    %188 = arith.addf %186, %187 : vector<8x64xf32>
    %189 = arith.mulf %188, %175 : vector<8x64xf32>
    %cst_82 = arith.constant 0.000000e+00 : f32
    %190 = vector.broadcast %cst_82 : f32 to vector<8x64xf32>
    %191 = arith.subf %190, %169 : vector<8x64xf32>
    %192 = arith.mulf %191, %169 : vector<8x64xf32>
    %193 = math.exp %192 : vector<8x64xf32>
    %194 = arith.mulf %189, %193 : vector<8x64xf32>
    %cst_83 = arith.constant 1.000000e+00 : f32
    %195 = vector.broadcast %cst_83 : f32 to vector<8x64xf32>
    %196 = arith.subf %195, %194 : vector<8x64xf32>
    %197 = arith.mulf %168, %196 : vector<8x64xf32>
    %cst_84 = arith.constant 1.000000e+00 : f32
    %198 = vector.broadcast %cst_84 : f32 to vector<8x64xf32>
    %199 = arith.addf %198, %197 : vector<8x64xf32>
    %200 = arith.mulf %161, %199 : vector<8x64xf32>
    %c0_85 = arith.constant 0 : index
    %c0_86 = arith.constant 0 : index
    %201 = vector.load %arg13[%c0_85, %c0_86] : memref<64x32xf32, #tpu.memory_space<vmem>>, vector<64x32xf32>
    %cst_87 = arith.constant dense<0.000000e+00> : vector<8x32xf32>
    %202 = tpu.matmul %200, %201, %cst_87 {dimension_numbers = #tpu.dot_dimension_numbers<[1], [0], [0], [1], [0, 0, 1, 1], [], []>} : vector<8x64xf32>, vector<64x32xf32>, vector<8x32xf32> -> vector<8x32xf32>
    %203 = arith.addf %132, %202 : vector<8x32xf32>
    %c0_88 = arith.constant 0 : index
    %c0_89 = arith.constant 0 : index
    %204 = vector.load %arg14[%c0_88, %c0_89] : memref<1x32xf32, #tpu.memory_space<vmem>>, vector<1x32xf32>
    %205 = vector.broadcast %204 : vector<1x32xf32> to vector<8x32xf32>
    %206 = arith.addf %203, %205 : vector<8x32xf32>
    %c0_90 = arith.constant 0 : index
    %c0_91 = arith.constant 0 : index
    %c0_92 = arith.constant 0 : index
    %207 = vector.load %arg15[%c0_90, %c0_91, %c0_92] : memref<1x8x32xf32, #tpu.memory_space<vmem>>, vector<1x8x32xf32>
    %208 = vector.shape_cast %207 : vector<1x8x32xf32> to vector<8x32xf32>
    %209 = vector.shape_cast %206 : vector<8x32xf32> to vector<1x8x32xf32>
    tpu.vector_store %arg15[%c0_90, %c0_91, %c0_92], %209 {strides = array<i32>} : memref<1x8x32xf32, #tpu.memory_space<vmem>>, vector<1x8x32xf32>,
    return
  }
  func.func @transform_0(%arg0: i32) -> (i32, i32, i32) {
    %c0_i32 = arith.constant 0 : i32
    %c0_i32_0 = arith.constant 0 : i32
    %c0_i32_1 = arith.constant 0 : i32
    return %arg0, %c0_i32, %c0_i32_0 : i32, i32, i32
  }
  func.func @transform_1(%arg0: i32) -> (i32, i32, i32, i32) {
    %c0_i32 = arith.constant 0 : i32
    %c0_i32_0 = arith.constant 0 : i32
    %c0_i32_1 = arith.constant 0 : i32
    %c0_i32_2 = arith.constant 0 : i32
    return %arg0, %c0_i32, %c0_i32_0, %c0_i32_1 : i32, i32, i32, i32
  }
  func.func @transform_2(%arg0: i32) -> (i32, i32) {
    %c0_i32 = arith.constant 0 : i32
    %c0_i32_0 = arith.constant 0 : i32
    %c0_i32_1 = arith.constant 0 : i32
    return %c0_i32, %c0_i32_0 : i32, i32
  }
  func.func @transform_3(%arg0: i32) -> (i32, i32) {
    %c0_i32 = arith.constant 0 : i32
    %c0_i32_0 = arith.constant 0 : i32
    %c0_i32_1 = arith.constant 0 : i32
    return %c0_i32, %c0_i32_0 : i32, i32
  }
  func.func @transform_4(%arg0: i32) -> (i32, i32) {
    %c0_i32 = arith.constant 0 : i32
    %c0_i32_0 = arith.constant 0 : i32
    %c0_i32_1 = arith.constant 0 : i32
    return %c0_i32, %c0_i32_0 : i32, i32
  }
  func.func @transform_5(%arg0: i32) -> (i32, i32) {
    %c0_i32 = arith.constant 0 : i32
    %c0_i32_0 = arith.constant 0 : i32
    %c0_i32_1 = arith.constant 0 : i32
    return %c0_i32, %c0_i32_0 : i32, i32
  }
  func.func @transform_6(%arg0: i32) -> (i32, i32) {
    %c0_i32 = arith.constant 0 : i32
    %c0_i32_0 = arith.constant 0 : i32
    %c0_i32_1 = arith.constant 0 : i32
    return %c0_i32, %c0_i32_0 : i32, i32
  }
  func.func @transform_7(%arg0: i32) -> (i32, i32) {
    %c0_i32 = arith.constant 0 : i32
    %c0_i32_0 = arith.constant 0 : i32
    %c0_i32_1 = arith.constant 0 : i32
    return %c0_i32, %c0_i32_0 : i32, i32
  }
  func.func @transform_8(%arg0: i32) -> (i32, i32) {
    %c0_i32 = arith.constant 0 : i32
    %c0_i32_0 = arith.constant 0 : i32
    %c0_i32_1 = arith.constant 0 : i32
    return %c0_i32, %c0_i32_0 : i32, i32
  }
  func.func @transform_9(%arg0: i32) -> (i32, i32) {
    %c0_i32 = arith.constant 0 : i32
    %c0_i32_0 = arith.constant 0 : i32
    %c0_i32_1 = arith.constant 0 : i32
    return %c0_i32, %c0_i32_0 : i32, i32
  }
  func.func @transform_10(%arg0: i32) -> (i32, i32) {
    %c0_i32 = arith.constant 0 : i32
    %c0_i32_0 = arith.constant 0 : i32
    %c0_i32_1 = arith.constant 0 : i32
    return %c0_i32, %c0_i32_0 : i32, i32
  }
  func.func @transform_11(%arg0: i32) -> (i32, i32) {
    %c0_i32 = arith.constant 0 : i32
    %c0_i32_0 = arith.constant 0 : i32
    %c0_i32_1 = arith.constant 0 : i32
    return %c0_i32, %c0_i32_0 : i32, i32
  }
  func.func @transform_12(%arg0: i32) -> (i32, i32) {
    %c0_i32 = arith.constant 0 : i32
    %c0_i32_0 = arith.constant 0 : i32
    %c0_i32_1 = arith.constant 0 : i32
    return %c0_i32, %c0_i32_0 : i32, i32
  }
  func.func @transform_13(%arg0: i32) -> (i32, i32) {
    %c0_i32 = arith.constant 0 : i32
    %c0_i32_0 = arith.constant 0 : i32
    %c0_i32_1 = arith.constant 0 : i32
    return %c0_i32, %c0_i32_0 : i32, i32
  }
  func.func @transform_14(%arg0: i32) -> (i32, i32, i32) {
    %c0_i32 = arith.constant 0 : i32
    %c0_i32_0 = arith.constant 0 : i32
    %c0_i32_1 = arith.constant 0 : i32
    return %arg0, %c0_i32, %c0_i32_0 : i32, i32, i32
  }
}

</mosaic_0001>

<llo_original>
// kernel: tpu_custom_call.1
$region0: #{tpu_custom_call.1}
  #allocation0 [shape = 'u32[]', space=smem, size = 0x4, offset = 0x4, fixed_abs, tag = 'smem constant byte address 0x4 - core index']
  #allocation1 [shape = 'u32[144,128]{1,0:T(1,128)}', space=vmem, size = 0x12000, scoped, tag = 'internal scratch']
  %s0 = inlined_call_operand.hbm [shape: f32[2,8,32], index: 0, kind: input, shape index: {}]
  %s1 = inlined_call_operand.hbm [shape: s32[2,1,8,8], index: 1, kind: input, shape index: {}]
  %s2 = inlined_call_operand.vmem [shape: f32[1,32], index: 2, kind: input, shape index: {}]
  %s3 = inlined_call_operand.vmem [shape: f32[1,32], index: 3, kind: input, shape index: {}]
  %s4 = inlined_call_operand.vmem [shape: f32[32,96], index: 4, kind: input, shape index: {}]
  %s5 = inlined_call_operand.vmem [shape: f32[1,96], index: 5, kind: input, shape index: {}]
  %s6 = inlined_call_operand.vmem [shape: f32[32,32], index: 6, kind: input, shape index: {}]
  %s7 = inlined_call_operand.vmem [shape: f32[1,32], index: 7, kind: input, shape index: {}]
  %s8 = inlined_call_operand.vmem [shape: f32[1,32], index: 8, kind: input, shape index: {}]
  %s9 = inlined_call_operand.vmem [shape: f32[1,32], index: 9, kind: input, shape index: {}]
  %s10 = inlined_call_operand.vmem [shape: f32[32,64], index: 10, kind: input, shape index: {}]
  %s11 = inlined_call_operand.vmem [shape: f32[1,64], index: 11, kind: input, shape index: {}]
  %s12 = inlined_call_operand.vmem [shape: f32[64,32], index: 12, kind: input, shape index: {}]
  %s13 = inlined_call_operand.vmem [shape: f32[1,32], index: 13, kind: input, shape index: {}]
  %s14 = inlined_call_operand.hbm [shape: f32[2,8,32], index: 14, kind: output, shape index: {}]
  %s15 = sld [smem:[#allocation0]]
  $region97: #{tpu_custom_call.1} parent=0
    _
  %s17 = ssub.s32 1, %s15
  %s18 = scalar_select 0, %s17, %s15
  $region1: #{tpu_custom_call.1} parent=0
    #allocation2 [shape = 'u8[8192]{0}', space=vmem, size = 0x2000, scoped, tag = 'input window, operand 0']
    #allocation3 [shape = 's32[2]{0}', space=sflag, size = 0x8, scoped, tag = 'scoped memory for tpu_custom_call.1']
    #allocation4 [shape = 's32[2]{0}', space=sflag, size = 0x8, scoped, tag = 'scoped memory for tpu_custom_call.1']
    #allocation5 [shape = 'u8[8192]{0}', space=vmem, size = 0x2000, scoped, tag = 'input window, operand 1']
    #allocation6 [shape = 's32[2]{0}', space=sflag, size = 0x8, scoped, tag = 'scoped memory for tpu_custom_call.1']
    #allocation7 [shape = 'u8[8192]{0}', space=vmem, size = 0x2000, scoped, tag = 'output window, operand 0']
    %19 = vsyncpa [#allocation3], 0
    %s20 = scalar_lea.sflag [#allocation3], 1
    %21 = vsyncpa %s20, 0
    %22 = vsyncpa [#allocation6], 0
    %s23 = scalar_lea.sflag [#allocation6], 1
    %24 = vsyncpa %s23, 0
    %25 = vsyncpa [#allocation4], 0
    %s26 = scalar_lea.sflag [#allocation4], 1
    %27 = vsyncpa %s26, 0
    loop: start=0, step=1, limit=4
    $region2: #{tpu_custom_call.1} parent=1 // loop_pre_header
      _
    $region3: #{tpu_custom_call.1} parent=1 // loop_header
      %s29 = sphi 0, %s33
      %p30 = scmp.ge.s32.totalorder %s29, 4
      %s39 = sphi 0, %s41
      %s42 = sphi 0, %s39
      %s43 = sphi 0, %s42
      %s59 = sphi 0, %s43
      %s65 = sphi 0, %s67
      %s68 = sphi 0, %s65
      %s69 = sphi 0, %s68
      %s85 = sphi 0, %s69
      %s89 = sphi 0, %s89
      %s91 = sphi 0, %s89
      %s92 = sphi 0, %s91
      %s106 = sphi 0, %s92
      %s110 = sphi 0, %s110
      %s112 = sphi 0, %s110
      %s113 = sphi 0, %s112
      %s127 = sphi 0, %s113
      %s131 = sphi 0, %s131
      %s133 = sphi 0, %s131
      %s134 = sphi 0, %s133
      %s148 = sphi 0, %s134
      %s152 = sphi 0, %s152
      %s154 = sphi 0, %s152
      %s155 = sphi 0, %s154
      %s169 = sphi 0, %s155
      %s173 = sphi 0, %s173
      %s175 = sphi 0, %s173
      %s176 = sphi 0, %s175
      %s190 = sphi 0, %s176
      %s194 = sphi 0, %s194
      %s196 = sphi 0, %s194
      %s197 = sphi 0, %s196
      %s211 = sphi 0, %s197
      %s215 = sphi 0, %s215
      %s217 = sphi 0, %s215
      %s218 = sphi 0, %s217
      %s232 = sphi 0, %s218
      %s236 = sphi 0, %s236
      %s238 = sphi 0, %s236
      %s239 = sphi 0, %s238
      %s253 = sphi 0, %s239
      %s257 = sphi 0, %s257
      %s259 = sphi 0, %s257
      %s260 = sphi 0, %s259
      %s274 = sphi 0, %s260
      %s278 = sphi 0, %s278
      %s280 = sphi 0, %s278
      %s281 = sphi 0, %s280
      %s295 = sphi 0, %s281
      %s299 = sphi 0, %s299
      %s301 = sphi 0, %s299
      %s302 = sphi 0, %s301
      %s316 = sphi 0, %s302
      %s320 = sphi 0, %s320
      %s322 = sphi 0, %s320
      %s323 = sphi 0, %s322
      %s337 = sphi 0, %s323
      %s343 = sphi 0, %s345
      %s346 = sphi 0, %s343
      %s347 = sphi 0, %s346
      %s363 = sphi 0, %s347
    $region4: #{tpu_custom_call.1} parent=1 // loop_header_branch
      %32 = sbr.rel (%p30) target = $region8
    $region5: #{tpu_custom_call.1} parent=1 // loop_body
      %s34 = ssub.s32 %s29, 1
      %s35 = ssub.s32 %s29, 2
      %s36 = sadd.s32 %s29, 1
      %s37 = ssub.s32 %s29, %s36
      %p38 = scmp.eq.s32.totalorder %s37, 0
      %s40 = sadd.s32 %s39, 1
      %s41 = scalar_select %p38, %s39, %s40
      %p44 = pneg %p38
      %p45 = scmp.eq.s32.totalorder %s29, 1
      %p46 = por %p44, %p45
      %p47 = scmp.ne.s32.totalorder %s39, %s42
      %p48 = scmp.eq.s32.totalorder %s29, 0
      %p49 = por %p47, %p48
      %p50 = scmp.ne.s32.totalorder %s39, %s42
      %p51 = scmp.eq.s32.totalorder %s34, 1
      %p52 = por %p50, %p51
      %p53 = scmp.ne.s32.totalorder %s42, %s43
      %p54 = scmp.eq.s32.totalorder %s34, 0
      %p55 = por %p53, %p54
      %p56 = scmp.ne.s32.totalorder %s42, %s43
      %p57 = scmp.eq.s32.totalorder %s35, 1
      %p58 = por %p56, %p57
      %p60 = scmp.ne.s32.totalorder %s43, %s59
      %p61 = scmp.eq.s32.totalorder %s35, 0
      %p62 = por %p60, %p61
      %s63 = ssub.s32 %s29, %s36
      %p64 = scmp.eq.s32.totalorder %s63, 0
      %s66 = sadd.s32 %s65, 1
      %s67 = scalar_select %p64, %s65, %s66
      %p70 = pneg %p64
      %p71 = scmp.eq.s32.totalorder %s29, 1
      %p72 = por %p70, %p71
      %p73 = scmp.ne.s32.totalorder %s65, %s68
      %p74 = scmp.eq.s32.totalorder %s29, 0
      %p75 = por %p73, %p74
      %p76 = scmp.ne.s32.totalorder %s65, %s68
      %p77 = scmp.eq.s32.totalorder %s34, 1
      %p78 = por %p76, %p77
      %p79 = scmp.ne.s32.totalorder %s68, %s69
      %p80 = scmp.eq.s32.totalorder %s34, 0
      %p81 = por %p79, %p80
      %p82 = scmp.ne.s32.totalorder %s68, %s69
      %p83 = scmp.eq.s32.totalorder %s35, 1
      %p84 = por %p82, %p83
      %p86 = scmp.ne.s32.totalorder %s69, %s85
      %p87 = scmp.eq.s32.totalorder %s35, 0
      %p88 = por %p86, %p87
      %s90 = sadd.s32 %s89, 1
      %p93 = scmp.eq.s32.totalorder %s29, 1
      %p94 = scmp.ne.s32.totalorder %s89, %s91
      %p95 = scmp.eq.s32.totalorder %s29, 0
      %p96 = por %p94, %p95
      %p97 = scmp.ne.s32.totalorder %s89, %s91
      %p98 = scmp.eq.s32.totalorder %s34, 1
      %p99 = por %p97, %p98
      %p100 = scmp.ne.s32.totalorder %s91, %s92
      %p101 = scmp.eq.s32.totalorder %s34, 0
      %p102 = por %p100, %p101
      %p103 = scmp.ne.s32.totalorder %s91, %s92
      %p104 = scmp.eq.s32.totalorder %s35, 1
      %p105 = por %p103, %p104
      %p107 = scmp.ne.s32.totalorder %s92, %s106
      %p108 = scmp.eq.s32.totalorder %s35, 0
      %p109 = por %p107, %p108
      %s111 = sadd.s32 %s110, 1
      %p114 = scmp.eq.s32.totalorder %s29, 1
      %p115 = scmp.ne.s32.totalorder %s110, %s112
      %p116 = scmp.eq.s32.totalorder %s29, 0
      %p117 = por %p115, %p116
      %p118 = scmp.ne.s32.totalorder %s110, %s112
      %p119 = scmp.eq.s32.totalorder %s34, 1
      %p120 = por %p118, %p119
      %p121 = scmp.ne.s32.totalorder %s112, %s113
      %p122 = scmp.eq.s32.totalorder %s34, 0
      %p123 = por %p121, %p122
      %p124 = scmp.ne.s32.totalorder %s112, %s113
      %p125 = scmp.eq.s32.totalorder %s35, 1
      %p126 = por %p124, %p125
      %p128 = scmp.ne.s32.totalorder %s113, %s127
      %p129 = scmp.eq.s32.totalorder %s35, 0
      %p130 = por %p128, %p129
      %s132 = sadd.s32 %s131, 1
      %p135 = scmp.eq.s32.totalorder %s29, 1
      %p136 = scmp.ne.s32.totalorder %s131, %s133
      %p137 = scmp.eq.s32.totalorder %s29, 0
      %p138 = por %p136, %p137
      %p139 = scmp.ne.s32.totalorder %s131, %s133
      %p140 = scmp.eq.s32.totalorder %s34, 1
      %p141 = por %p139, %p140
      %p142 = scmp.ne.s32.totalorder %s133, %s134
      %p143 = scmp.eq.s32.totalorder %s34, 0
      %p144 = por %p142, %p143
      %p145 = scmp.ne.s32.totalorder %s133, %s134
      %p146 = scmp.eq.s32.totalorder %s35, 1
      %p147 = por %p145, %p146
      %p149 = scmp.ne.s32.totalorder %s134, %s148
      %p150 = scmp.eq.s32.totalorder %s35, 0
      %p151 = por %p149, %p150
      %s153 = sadd.s32 %s152, 1
      %p156 = scmp.eq.s32.totalorder %s29, 1
      %p157 = scmp.ne.s32.totalorder %s152, %s154
      %p158 = scmp.eq.s32.totalorder %s29, 0
      %p159 = por %p157, %p158
      %p160 = scmp.ne.s32.totalorder %s152, %s154
      %p161 = scmp.eq.s32.totalorder %s34, 1
      %p162 = por %p160, %p161
      %p163 = scmp.ne.s32.totalorder %s154, %s155
      %p164 = scmp.eq.s32.totalorder %s34, 0
      %p165 = por %p163, %p164
      %p166 = scmp.ne.s32.totalorder %s154, %s155
      %p167 = scmp.eq.s32.totalorder %s35, 1
      %p168 = por %p166, %p167
      %p170 = scmp.ne.s32.totalorder %s155, %s169
      %p171 = scmp.eq.s32.totalorder %s35, 0
      %p172 = por %p170, %p171
      %s174 = sadd.s32 %s173, 1
      %p177 = scmp.eq.s32.totalorder %s29, 1
      %p178 = scmp.ne.s32.totalorder %s173, %s175
      %p179 = scmp.eq.s32.totalorder %s29, 0
      %p180 = por %p178, %p179
      %p181 = scmp.ne.s32.totalorder %s173, %s175
      %p182 = scmp.eq.s32.totalorder %s34, 1
      %p183 = por %p181, %p182
      %p184 = scmp.ne.s32.totalorder %s175, %s176
      %p185 = scmp.eq.s32.totalorder %s34, 0
      %p186 = por %p184, %p185
      %p187 = scmp.ne.s32.totalorder %s175, %s176
      %p188 = scmp.eq.s32.totalorder %s35, 1
      %p189 = por %p187, %p188
      %p191 = scmp.ne.s32.totalorder %s176, %s190
      %p192 = scmp.eq.s32.totalorder %s35, 0
      %p193 = por %p191, %p192
      %s195 = sadd.s32 %s194, 1
      %p198 = scmp.eq.s32.totalorder %s29, 1
      %p199 = scmp.ne.s32.totalorder %s194, %s196
      %p200 = scmp.eq.s32.totalorder %s29, 0
      %p201 = por %p199, %p200
      %p202 = scmp.ne.s32.totalorder %s194, %s196
      %p203 = scmp.eq.s32.totalorder %s34, 1
      %p204 = por %p202, %p203
      %p205 = scmp.ne.s32.totalorder %s196, %s197
      %p206 = scmp.eq.s32.totalorder %s34, 0
      %p207 = por %p205, %p206
      %p208 = scmp.ne.s32.totalorder %s196, %s197
      %p209 = scmp.eq.s32.totalorder %s35, 1
      %p210 = por %p208, %p209
      %p212 = scmp.ne.s32.totalorder %s197, %s211
      %p213 = scmp.eq.s32.totalorder %s35, 0
      %p214 = por %p212, %p213
      %s216 = sadd.s32 %s215, 1
      %p219 = scmp.eq.s32.totalorder %s29, 1
      %p220 = scmp.ne.s32.totalorder %s215, %s217
      %p221 = scmp.eq.s32.totalorder %s29, 0
      %p222 = por %p220, %p221
      %p223 = scmp.ne.s32.totalorder %s215, %s217
      %p224 = scmp.eq.s32.totalorder %s34, 1
      %p225 = por %p223, %p224
      %p226 = scmp.ne.s32.totalorder %s217, %s218
      %p227 = scmp.eq.s32.totalorder %s34, 0
      %p228 = por %p226, %p227
      %p229 = scmp.ne.s32.totalorder %s217, %s218
      %p230 = scmp.eq.s32.totalorder %s35, 1
      %p231 = por %p229, %p230
      %p233 = scmp.ne.s32.totalorder %s218, %s232
      %p234 = scmp.eq.s32.totalorder %s35, 0
      %p235 = por %p233, %p234
      %s237 = sadd.s32 %s236, 1
      %p240 = scmp.eq.s32.totalorder %s29, 1
      %p241 = scmp.ne.s32.totalorder %s236, %s238
      %p242 = scmp.eq.s32.totalorder %s29, 0
      %p243 = por %p241, %p242
      %p244 = scmp.ne.s32.totalorder %s236, %s238
      %p245 = scmp.eq.s32.totalorder %s34, 1
      %p246 = por %p244, %p245
      %p247 = scmp.ne.s32.totalorder %s238, %s239
      %p248 = scmp.eq.s32.totalorder %s34, 0
      %p249 = por %p247, %p248
      %p250 = scmp.ne.s32.totalorder %s238, %s239
      %p251 = scmp.eq.s32.totalorder %s35, 1
      %p252 = por %p250, %p251
      %p254 = scmp.ne.s32.totalorder %s239, %s253
      %p255 = scmp.eq.s32.totalorder %s35, 0
      %p256 = por %p254, %p255
      %s258 = sadd.s32 %s257, 1
      %p261 = scmp.eq.s32.totalorder %s29, 1
      %p262 = scmp.ne.s32.totalorder %s257, %s259
      %p263 = scmp.eq.s32.totalorder %s29, 0
      %p264 = por %p262, %p263
      %p265 = scmp.ne.s32.totalorder %s257, %s259
      %p266 = scmp.eq.s32.totalorder %s34, 1
      %p267 = por %p265, %p266
      %p268 = scmp.ne.s32.totalorder %s259, %s260
      %p269 = scmp.eq.s32.totalorder %s34, 0
      %p270 = por %p268, %p269
      %p271 = scmp.ne.s32.totalorder %s259, %s260
      %p272 = scmp.eq.s32.totalorder %s35, 1
      %p273 = por %p271, %p272
      %p275 = scmp.ne.s32.totalorder %s260, %s274
      %p276 = scmp.eq.s32.totalorder %s35, 0
      %p277 = por %p275, %p276
      %s279 = sadd.s32 %s278, 1
      %p282 = scmp.eq.s32.totalorder %s29, 1
      %p283 = scmp.ne.s32.totalorder %s278, %s280
      %p284 = scmp.eq.s32.totalorder %s29, 0
      %p285 = por %p283, %p284
      %p286 = scmp.ne.s32.totalorder %s278, %s280
      %p287 = scmp.eq.s32.totalorder %s34, 1
      %p288 = por %p286, %p287
      %p289 = scmp.ne.s32.totalorder %s280, %s281
      %p290 = scmp.eq.s32.totalorder %s34, 0
      %p291 = por %p289, %p290
      %p292 = scmp.ne.s32.totalorder %s280, %s281
      %p293 = scmp.eq.s32.totalorder %s35, 1
      %p294 = por %p292, %p293
      %p296 = scmp.ne.s32.totalorder %s281, %s295
      %p297 = scmp.eq.s32.totalorder %s35, 0
      %p298 = por %p296, %p297
      %s300 = sadd.s32 %s299, 1
      %p303 = scmp.eq.s32.totalorder %s29, 1
      %p304 = scmp.ne.s32.totalorder %s299, %s301
      %p305 = scmp.eq.s32.totalorder %s29, 0
      %p306 = por %p304, %p305
      %p307 = scmp.ne.s32.totalorder %s299, %s301
      %p308 = scmp.eq.s32.totalorder %s34, 1
      %p309 = por %p307, %p308
      %p310 = scmp.ne.s32.totalorder %s301, %s302
      %p311 = scmp.eq.s32.totalorder %s34, 0
      %p312 = por %p310, %p311
      %p313 = scmp.ne.s32.totalorder %s301, %s302
      %p314 = scmp.eq.s32.totalorder %s35, 1
      %p315 = por %p313, %p314
      %p317 = scmp.ne.s32.totalorder %s302, %s316
      %p318 = scmp.eq.s32.totalorder %s35, 0
      %p319 = por %p317, %p318
      %s321 = sadd.s32 %s320, 1
      %p324 = scmp.eq.s32.totalorder %s29, 1
      %p325 = scmp.ne.s32.totalorder %s320, %s322
      %p326 = scmp.eq.s32.totalorder %s29, 0
      %p327 = por %p325, %p326
      %p328 = scmp.ne.s32.totalorder %s320, %s322
      %p329 = scmp.eq.s32.totalorder %s34, 1
      %p330 = por %p328, %p329
      %p331 = scmp.ne.s32.totalorder %s322, %s323
      %p332 = scmp.eq.s32.totalorder %s34, 0
      %p333 = por %p331, %p332
      %p334 = scmp.ne.s32.totalorder %s322, %s323
      %p335 = scmp.eq.s32.totalorder %s35, 1
      %p336 = por %p334, %p335
      %p338 = scmp.ne.s32.totalorder %s323, %s337
      %p339 = scmp.eq.s32.totalorder %s35, 0
      %p340 = por %p338, %p339
      %s341 = ssub.s32 %s29, %s36
      %p342 = scmp.eq.s32.totalorder %s341, 0
      %s344 = sadd.s32 %s343, 1
      %s345 = scalar_select %p342, %s343, %s344
      %p348 = pneg %p342
      %p349 = scmp.eq.s32.totalorder %s29, 1
      %p350 = por %p348, %p349
      %p351 = scmp.ne.s32.totalorder %s343, %s346
      %p352 = scmp.eq.s32.totalorder %s29, 0
      %p353 = por %p351, %p352
      %p354 = scmp.ne.s32.totalorder %s343, %s346
      %p355 = scmp.eq.s32.totalorder %s34, 1
      %p356 = por %p354, %p355
      %p357 = scmp.ne.s32.totalorder %s346, %s347
      %p358 = scmp.eq.s32.totalorder %s34, 0
      %p359 = por %p357, %p358
      %p360 = scmp.ne.s32.totalorder %s346, %s347
      %p361 = scmp.eq.s32.totalorder %s35, 1
      %p362 = por %p360, %p361
      %p364 = scmp.ne.s32.totalorder %s347, %s363
      %p365 = scmp.eq.s32.totalorder %s35, 0
      %p366 = por %p364, %p365
      %p367 = scmp.le.s32.totalorder 1, %s29
      %p368 = scmp.lt.s32.totalorder %s29, 3
      %p369 = pnand %p367, %p368
      %p370 = pneg %p369
      // Predicated region
      $region9: #{tpu_custom_call.1} parent=5 // pred_check
        _
      $region10: #{tpu_custom_call.1} parent=5 // pred_check_branch
        %372 = sbr.rel (%p369) target = $region12
      $region11: #{tpu_custom_call.1} parent=5 // pred_region
        %s373 = ssub.s32 %s29, 1
        // Predicated region
        $region13: #{tpu_custom_call.1} parent=11 // pred_check
          %p374 = pneg %p102
        $region14: #{tpu_custom_call.1} parent=11 // pred_check_branch
          %376 = sbr.rel (%p374) target = $region16
        $region15: #{tpu_custom_call.1} parent=11 // pred_region
          _
        $region16: #{tpu_custom_call.1} parent=11 // pred_fallthru
          _
        // Predicated region
        $region17: #{tpu_custom_call.1} parent=11 // pred_check
          %p377 = pneg %p123
        $region18: #{tpu_custom_call.1} parent=11 // pred_check_branch
          %379 = sbr.rel (%p377) target = $region20
        $region19: #{tpu_custom_call.1} parent=11 // pred_region
          _
        $region20: #{tpu_custom_call.1} parent=11 // pred_fallthru
          _
        // Predicated region
        $region21: #{tpu_custom_call.1} parent=11 // pred_check
          %p380 = pneg %p144
        $region22: #{tpu_custom_call.1} parent=11 // pred_check_branch
          %382 = sbr.rel (%p380) target = $region24
        $region23: #{tpu_custom_call.1} parent=11 // pred_region
          _
        $region24: #{tpu_custom_call.1} parent=11 // pred_fallthru
          _
        // Predicated region
        $region25: #{tpu_custom_call.1} parent=11 // pred_check
          %p383 = pneg %p165
        $region26: #{tpu_custom_call.1} parent=11 // pred_check_branch
          %385 = sbr.rel (%p383) target = $region28
        $region27: #{tpu_custom_call.1} parent=11 // pred_region
          _
        $region28: #{tpu_custom_call.1} parent=11 // pred_fallthru
          _
        // Predicated region
        $region29: #{tpu_custom_call.1} parent=11 // pred_check
          %p386 = pneg %p186
        $region30: #{tpu_custom_call.1} parent=11 // pred_check_branch
          %388 = sbr.rel (%p386) target = $region32
        $region31: #{tpu_custom_call.1} parent=11 // pred_region
          _
        $region32: #{tpu_custom_call.1} parent=11 // pred_fallthru
          _
        // Predicated region
        $region33: #{tpu_custom_call.1} parent=11 // pred_check
          %p389 = pneg %p207
        $region34: #{tpu_custom_call.1} parent=11 // pred_check_branch
          %391 = sbr.rel (%p389) target = $region36
        $region35: #{tpu_custom_call.1} parent=11 // pred_region
          _
        $region36: #{tpu_custom_call.1} parent=11 // pred_fallthru
          _
        // Predicated region
        $region37: #{tpu_custom_call.1} parent=11 // pred_check
          %p392 = pneg %p228
        $region38: #{tpu_custom_call.1} parent=11 // pred_check_branch
          %394 = sbr.rel (%p392) target = $region40
        $region39: #{tpu_custom_call.1} parent=11 // pred_region
          _
        $region40: #{tpu_custom_call.1} parent=11 // pred_fallthru
          _
        // Predicated region
        $region41: #{tpu_custom_call.1} parent=11 // pred_check
          %p395 = pneg %p249
        $region42: #{tpu_custom_call.1} parent=11 // pred_check_branch
          %397 = sbr.rel (%p395) target = $region44
        $region43: #{tpu_custom_call.1} parent=11 // pred_region
          _
        $region44: #{tpu_custom_call.1} parent=11 // pred_fallthru
          _
        // Predicated region
        $region45: #{tpu_custom_call.1} parent=11 // pred_check
          %p398 = pneg %p270
        $region46: #{tpu_custom_call.1} parent=11 // pred_check_branch
          %400 = sbr.rel (%p398) target = $region48
        $region47: #{tpu_custom_call.1} parent=11 // pred_region
          _
        $region48: #{tpu_custom_call.1} parent=11 // pred_fallthru
          _
        // Predicated region
        $region49: #{tpu_custom_call.1} parent=11 // pred_check
          %p401 = pneg %p291
        $region50: #{tpu_custom_call.1} parent=11 // pred_check_branch
          %403 = sbr.rel (%p401) target = $region52
        $region51: #{tpu_custom_call.1} parent=11 // pred_region
          _
        $region52: #{tpu_custom_call.1} parent=11 // pred_fallthru
          _
        // Predicated region
        $region53: #{tpu_custom_call.1} parent=11 // pred_check
          %p404 = pneg %p312
        $region54: #{tpu_custom_call.1} parent=11 // pred_check_branch
          %406 = sbr.rel (%p404) target = $region56
        $region55: #{tpu_custom_call.1} parent=11 // pred_region
          _
        $region56: #{tpu_custom_call.1} parent=11 // pred_fallthru
          _
        // Predicated region
        $region57: #{tpu_custom_call.1} parent=11 // pred_check
          %p407 = pneg %p333
        $region58: #{tpu_custom_call.1} parent=11 // pred_check_branch
          %409 = sbr.rel (%p407) target = $region60
        $region59: #{tpu_custom_call.1} parent=11 // pred_region
          _
        $region60: #{tpu_custom_call.1} parent=11 // pred_fallthru
          _
      $region12: #{tpu_custom_call.1} parent=5 // pred_fallthru
        _
      %p410 = scmp.lt.s32.totalorder %s29, 2
      // Predicated region
      $region61: #{tpu_custom_call.1} parent=5 // pred_check
        %p411 = pneg %p410
      $region62: #{tpu_custom_call.1} parent=5 // pred_check_branch
        %413 = sbr.rel (%p411) target = $region64
      $region63: #{tpu_custom_call.1} parent=5 // pred_region
        // Predicated region
        $region65: #{tpu_custom_call.1} parent=63 // pred_check
          %p414 = pneg %p49
        $region66: #{tpu_custom_call.1} parent=63 // pred_check_branch
          %416 = sbr.rel (%p414) target = $region68
        $region67: #{tpu_custom_call.1} parent=63 // pred_region
          %s417 = sand.u32 %s39, 1
          %s418 = scalar_lea.sflag [#allocation3], %s417
          %s419 = sand.u32 %s39, 1
          %s420 = smul.addr %s419, 8
          %s421 = scalar_lea.vmem [#allocation2], %s420
          %s423 = ssub.s32 128, 128
          %424 = vsyncadd %s418, %s423
          %s425 = smul.addr %s29, 128
          %s426 = scalar_lea.hbm %s0, %s425
          %s428 = sshll.u32 %s421, 4
          %s429 = int_to_ptr.vmem [resolvable:$true] %s428
          %431 = dma.hbm_to_vmem [thread:$0]  %s426, 128, %s429, %s418
        $region68: #{tpu_custom_call.1} parent=63 // pred_fallthru
          _
        // Predicated region
        $region69: #{tpu_custom_call.1} parent=63 // pred_check
          %p432 = pneg %p75
        $region70: #{tpu_custom_call.1} parent=63 // pred_check_branch
          %434 = sbr.rel (%p432) target = $region72
        $region71: #{tpu_custom_call.1} parent=63 // pred_region
          %s435 = sand.u32 %s65, 1
          %s436 = scalar_lea.sflag [#allocation6], %s435
          %s437 = sand.u32 %s65, 1
          %s438 = smul.addr %s437, 8
          %s439 = scalar_lea.vmem [#allocation5], %s438
          %s441 = ssub.s32 128, 128
          %442 = vsyncadd %s436, %s441
          %s443 = smul.addr %s29, 128
          %s444 = scalar_lea.hbm %s1, %s443
          %s446 = sshll.u32 %s439, 4
          %s447 = int_to_ptr.vmem [resolvable:$true] %s446
          %449 = dma.hbm_to_vmem [thread:$0]  %s444, 128, %s447, %s436
        $region72: #{tpu_custom_call.1} parent=63 // pred_fallthru
          _
      $region64: #{tpu_custom_call.1} parent=5 // pred_fallthru
        _
      %p450 = scmp.le.s32.totalorder 1, %s29
      %p451 = scmp.lt.s32.totalorder %s29, 3
      %p452 = pnand %p450, %p451
      %p453 = pneg %p452
      // Predicated region
      $region73: #{tpu_custom_call.1} parent=5 // pred_check
        _
      $region74: #{tpu_custom_call.1} parent=5 // pred_check_branch
        %455 = sbr.rel (%p452) target = $region76
      $region75: #{tpu_custom_call.1} parent=5 // pred_region
        %s456 = ssub.s32 %s29, 1
        %s457 = sand.u32 %s42, 1
        %s458 = scalar_lea.sflag [#allocation3], %s457
        %s459 = sand.u32 %s42, 1
        %s460 = smul.addr %s459, 8
        %s461 = scalar_lea.vmem [#allocation2], %s460
        // Predicated region
        $region77: #{tpu_custom_call.1} parent=75 // pred_check
          %p462 = pneg %p55
        $region78: #{tpu_custom_call.1} parent=75 // pred_check_branch
          %464 = sbr.rel (%p462) target = $region80
        $region79: #{tpu_custom_call.1} parent=75 // pred_region
          %465 = dma.done %s458, 128
        $region80: #{tpu_custom_call.1} parent=75 // pred_fallthru
          _
        %s466 = sand.u32 %s68, 1
        %s467 = scalar_lea.sflag [#allocation6], %s466
        %s468 = sand.u32 %s68, 1
        %s469 = smul.addr %s468, 8
        %s470 = scalar_lea.vmem [#allocation5], %s469
        // Predicated region
        $region81: #{tpu_custom_call.1} parent=75 // pred_check
          %p471 = pneg %p81
        $region82: #{tpu_custom_call.1} parent=75 // pred_check_branch
          %473 = sbr.rel (%p471) target = $region84
        $region83: #{tpu_custom_call.1} parent=75 // pred_region
          %474 = dma.done %s467, 128
        $region84: #{tpu_custom_call.1} parent=75 // pred_fallthru
          _
        %s475 = sand.u32 %s42, 1
        %s476 = scalar_lea.sflag [#allocation3], %s475
        %s477 = sand.u32 %s42, 1
        %s478 = smul.addr %s477, 8
        %s479 = scalar_lea.vmem [#allocation2], %s478
        %p480 = pneg %p55
        %p481 = pneg %p52
        %s482 = sand.u32 %s68, 1
        %s483 = scalar_lea.sflag [#allocation6], %s482
        %s484 = sand.u32 %s68, 1
        %s485 = smul.addr %s484, 8
        %s486 = scalar_lea.vmem [#allocation5], %s485
        %p487 = pneg %p81
        %p488 = pneg %p78
        %p489 = pneg %p102
        %p490 = pneg %p99
        %p491 = pneg %p123
        %p492 = pneg %p120
        %p493 = pneg %p144
        %p494 = pneg %p141
        %p495 = pneg %p165
        %p496 = pneg %p162
        %p497 = pneg %p186
        %p498 = pneg %p183
        %p499 = pneg %p207
        %p500 = pneg %p204
        %p501 = pneg %p228
        %p502 = pneg %p225
        %p503 = pneg %p249
        %p504 = pneg %p246
        %p505 = pneg %p270
        %p506 = pneg %p267
        %p507 = pneg %p291
        %p508 = pneg %p288
        %p509 = pneg %p312
        %p510 = pneg %p309
        %p511 = pneg %p333
        %p512 = pneg %p330
        %p513 = pneg %p359
        %p514 = pneg %p356
        %s515 = sand.u32 %s346, 1
        %s516 = scalar_lea.sflag [#allocation4], %s515
        %s517 = sand.u32 %s346, 1
        %s518 = smul.addr %s517, 8
        %s519 = scalar_lea.vmem [#allocation7], %s518
        %v520 = vld [vmem:[%s461] sm:$0xff]
        %v521 = vld [vmem:[%s470] sm:$0xff]
        %v522 = vld [vmem:[%s2] sm:$0x1]
        %v523 = vld [vmem:[%s3] sm:$0x1]
        %vm524 = vcmask 261120
        %v525 = vsel %vm524, %v520, 0.0
        %526 = vadd.xlane.f32.xlu0 %v525
        %v527 = vpop.xlane.xlu0 %526
        %v528 = vrcp.pop 32.0
        %v529 = vmul.f32 %v527, %v528
        %v530 = vsub.f32 %v520, %v529
        %v531 = vmul.f32 %v530, %v530
        %v532 = vsel %vm524, %v531, 0.0
        %533 = vadd.xlane.f32.xlu0 %v532
        %v534 = vpop.xlane.xlu0 %533
        %v535 = vrcp.pop 31.0
        %v536 = vmul.f32 %v534, %v535
        %v537 = vrsqrt.pop %v536
        %v538 = vmul.f32 %v536, %v537
        %vm539 = vcmp.eq.f32.partialorder %v536, inf
        %v540 = vsel %vm539, %v536, %v538
        %vm541 = vcmp.eq.f32.partialorder %v536, 0.0
        %v542 = vand.u32 %v536, 2147483648
        %v543 = vsel %vm541, %v542, %v540
        %v545 = vlaneseq
        %v546 = vshrl.u32 %v545, 7
        %v547 = vsub.s32 0, %v546
        %v548 = vrot.slane %v522, %v547
        %v550 = vmul.f32 %v548, %v530
        %v551 = vadd.f32 %v543, 1e-06
        %v552 = vrcp.pop %v551
        %v553 = vmul.f32 %v550, %v552
        %v555 = vlaneseq
        %v556 = vshrl.u32 %v555, 7
        %v557 = vsub.s32 0, %v556
        %v558 = vrot.slane %v523, %v557
        %v560 = vadd.f32 %v553, %v558
        %v561 = vld [vmem:[%s4] sm:$0xff]
        %v562 = vld [vmem:[%s4 + $0x8] sm:$0xff]
        %v563 = vld [vmem:[%s4 + $0x10] sm:$0xff]
        %v564 = vld [vmem:[%s4 + $0x18] sm:$0xff]
        %v565 = vld [vmem:[%s5] sm:$0x1]
        %v567 = vlaneseq
        %v568 = vshrl.u32 %v567, 7
        %v569 = vsub.s32 0, %v568
        %v570 = vrot.slane %v565, %v569
        %v573 = vsel %vm524, %v560, 0
        %575 = vmatprep.subr.mxu0 0.0
        %576 = vmatpush1.msra.mxu0 %v561
        %577 = vmatprep.subr.mxu0 0.0
        %578 = vmatpush1.msra.mxu0 %v562
        %579 = vmatprep.subr.mxu0 0.0
        %580 = vmatpush1.msra.mxu0 %v563
        %581 = vmatprep.subr.mxu0 0.0
        %582 = vmatpush1.msra.mxu0 %v564
        %583 = vmatprep.subr.mxu0 0.0
        %584 = vmatpush1.msra.mxu0 0.0
        %585 = vmatprep.subr.mxu0 0.0
        %586 = vmatpush1.msra.mxu0 0.0
        %587 = vmatprep.subr.mxu0 0.0
        %588 = vmatpush1.msra.mxu0 0.0
        %589 = vmatprep.subr.mxu0 0.0
        %590 = vmatpush1.msra.mxu0 0.0
        %591 = vmatprep.subr.mxu0 0.0
        %592 = vmatpush1.msra.mxu0 0.0
        %593 = vmatprep.subr.mxu0 0.0
        %594 = vmatpush1.msra.mxu0 0.0
        %595 = vmatprep.subr.mxu0 0.0
        %596 = vmatpush1.msra.mxu0 0.0
        %597 = vmatprep.subr.mxu0 0.0
        %598 = vmatpush1.msra.mxu0 0.0
        %599 = vmatprep.subr.mxu0 0.0
        %600 = vmatpush1.msra.mxu0 0.0
        %601 = vmatprep.subr.mxu0 0.0
        %602 = vmatpush1.msra.mxu0 0.0
        %603 = vmatprep.subr.mxu0 0.0
        %604 = vmatpush1.msra.mxu0 0.0
        %605 = vmatprep.subr.mxu0 0.0
        %606 = vmatpush1.msra.mxu0 0.0
        %607 = vmatprep.subr.mxu0 0.0
        %608 = vmatpush1.msra.mxu0 0.0
        %609 = vmatprep.subr.mxu0 0.0
        %610 = vmatpush1.msra.mxu0 0.0
        %611 = vmatprep.subr.mxu0 0.0
        %612 = vmatpush1.msra.mxu0 0.0
        %613 = vmatprep.subr.mxu0 0.0
        %614 = vmatpush1.msra.mxu0 0.0
        %615 = vmatprep.subr.mxu0 0.0
        %616 = vmatpush1.msra.mxu0 0.0
        %617 = vmatprep.subr.mxu0 0.0
        %618 = vmatpush1.msra.mxu0 0.0
        %619 = vmatprep.subr.mxu0 0.0
        %620 = vmatpush1.msra.mxu0 0.0
        %621 = vmatprep.subr.mxu0 0.0
        %622 = vmatpush1.msra.mxu0 0.0
        %623 = vmatprep.subr.mxu0 0.0
        %624 = vmatpush1.msra.mxu0 0.0
        %625 = vmatprep.subr.mxu0 0.0
        %626 = vmatpush1.msra.mxu0 0.0
        %627 = vmatprep.subr.mxu0 0.0
        %628 = vmatpush1.msra.mxu0 0.0
        %629 = vmatprep.subr.mxu0 0.0
        %630 = vmatpush1.msra.mxu0 0.0
        %631 = vmatprep.subr.mxu0 0.0
        %632 = vmatpush1.msra.mxu0 0.0
        %633 = vmatprep.subr.mxu0 0.0
        %634 = vmatpush1.msra.mxu0 0.0
        %635 = vmatprep.subr.mxu0 0.0
        %636 = vmatpush1.msra.mxu0 0.0
        %637 = vmatprep.subr.mxu0 0.0
        %638 = vmatpush1.msra.mxu0 0.0
        %639 = vmatprep.mubr.f32.mxu0 0.0
        %640 = vmatmul.mubr.f32.gmra.mrb[0].mxu0 %v573
        %v641 = vpop.f32.mrb[0].mxu0
        %v642 = vadd.f32 %v570, %v641
        %v643 = vpop.f32.mrb[0].mxu0
        %644 = vdwg.mxu0
        %v645 = vld [vmem:[%s6] sm:$0xff]
        %v646 = vld [vmem:[%s6 + $0x8] sm:$0xff]
        %v647 = vld [vmem:[%s6 + $0x10] sm:$0xff]
        %v648 = vld [vmem:[%s6 + $0x18] sm:$0xff]
        %v649 = vld [vmem:[%s7] sm:$0x1]
        %v651 = vlaneseq
        %v652 = vshrl.u32 %v651, 7
        %v653 = vsub.s32 0, %v652
        %v654 = vrot.slane %v649, %v653
        %v656 = vadd.f32 %v654, 0.0
        %658 = vrot.lane.b32.xlu0 %v642, 96
        %v659 = vpop.permute.xlu0 %658
        %vm660 = vcmask 64512
        %v661 = vsel %vm660, %v642, 0
        %v663 = vsel %vm660, %v659, 0
        %665 = vmatprep.subr.mxu0 0.0
        %666 = vmatpush1.xpose.msra.mxu0 %v663
        %667 = vmatprep.subr.mxu0 0.0
        %668 = vmatpush1.xpose.msra.mxu0 0.0
        %669 = vmatprep.subr.mxu0 0.0
        %670 = vmatpush1.xpose.msra.mxu0 0.0
        %671 = vmatprep.subr.mxu0 0.0
        %672 = vmatpush1.xpose.msra.mxu0 0.0
        %673 = vmatprep.subr.mxu0 0.0
        %674 = vmatpush1.xpose.msra.mxu0 0.0
        %675 = vmatprep.subr.mxu0 0.0
        %676 = vmatpush1.xpose.msra.mxu0 0.0
        %677 = vmatprep.subr.mxu0 0.0
        %678 = vmatpush1.xpose.msra.mxu0 0.0
        %679 = vmatprep.subr.mxu0 0.0
        %680 = vmatpush1.xpose.msra.mxu0 0.0
        %681 = vmatprep.subr.mxu0 0.0
        %682 = vmatpush1.xpose.msra.mxu0 0.0
        %683 = vmatprep.subr.mxu0 0.0
        %684 = vmatpush1.xpose.msra.mxu0 0.0
        %685 = vmatprep.subr.mxu0 0.0
        %686 = vmatpush1.xpose.msra.mxu0 0.0
        %687 = vmatprep.subr.mxu0 0.0
        %688 = vmatpush1.xpose.msra.mxu0 0.0
        %689 = vmatprep.subr.mxu0 0.0
        %690 = vmatpush1.xpose.msra.mxu0 0.0
        %691 = vmatprep.subr.mxu0 0.0
        %692 = vmatpush1.xpose.msra.mxu0 0.0
        %693 = vmatprep.subr.mxu0 0.0
        %694 = vmatpush1.xpose.msra.mxu0 0.0
        %695 = vmatprep.subr.mxu0 0.0
        %696 = vmatpush1.xpose.msra.mxu0 0.0
        %697 = vmatprep.subr.mxu0 0.0
        %698 = vmatpush1.xpose.msra.mxu0 0.0
        %699 = vmatprep.subr.mxu0 0.0
        %700 = vmatpush1.xpose.msra.mxu0 0.0
        %701 = vmatprep.subr.mxu0 0.0
        %702 = vmatpush1.xpose.msra.mxu0 0.0
        %703 = vmatprep.subr.mxu0 0.0
        %704 = vmatpush1.xpose.msra.mxu0 0.0
        %705 = vmatprep.subr.mxu0 0.0
        %706 = vmatpush1.xpose.msra.mxu0 0.0
        %707 = vmatprep.subr.mxu0 0.0
        %708 = vmatpush1.xpose.msra.mxu0 0.0
        %709 = vmatprep.subr.mxu0 0.0
        %710 = vmatpush1.xpose.msra.mxu0 0.0
        %711 = vmatprep.subr.mxu0 0.0
        %712 = vmatpush1.xpose.msra.mxu0 0.0
        %713 = vmatprep.subr.mxu0 0.0
        %714 = vmatpush1.xpose.msra.mxu0 0.0
        %715 = vmatprep.subr.mxu0 0.0
        %716 = vmatpush1.xpose.msra.mxu0 0.0
        %717 = vmatprep.subr.mxu0 0.0
        %718 = vmatpush1.xpose.msra.mxu0 0.0
        %719 = vmatprep.subr.mxu0 0.0
        %720 = vmatpush1.xpose.msra.mxu0 0.0
        %721 = vmatprep.subr.mxu0 0.0
        %722 = vmatpush1.xpose.msra.mxu0 0.0
        %723 = vmatprep.subr.mxu0 0.0
        %724 = vmatpush1.xpose.msra.mxu0 0.0
        %725 = vmatprep.subr.mxu0 0.0
        %726 = vmatpush1.xpose.msra.mxu0 0.0
        %727 = vmatprep.subr.mxu0 0.0
        %728 = vmatpush1.xpose.msra.mxu0 0.0
        %729 = vmatprep.mubr.f32.mxu0 0.0
        %730 = vmatmul.mubr.f32.gmra.mrb[0].mxu0 %v661
        %v731 = vpop.f32.mrb[0].mxu0
        %v732 = vadd.f32 0.0, %v731
        %v733 = vpop.f32.mrb[0].mxu0
        %734 = vdwg.mxu0
        %v735 = vmul.f32 %v732, 0.35355338
        %vm736 = vcmp.eq.s32.totalorder %v521, 0
        %v737 = vsel %vm736, -1e+09, %v735
        %v738 = vsel %vm660, %v737, -inf
        %739 = vmax.xlane.f32.xlu0 %v738
        %v740 = vpop.xlane.xlu0 %739
        %v741 = vsub.f32 %v737, %v740
        %v742 = vmul.f32 %v741, 1.442695
        %v743 = vpow.pop %v742
        %v744 = vsel %vm660, %v743, 0.0
        %745 = vadd.xlane.f32.xlu0 %v744
        %v746 = vpop.xlane.xlu0 %745
        %v747 = vrcp.pop %v746
        %v748 = vmul.f32 %v743, %v747
        %749 = vrot.lane.b32.xlu0 %v642, 64
        %v750 = vpop.permute.xlu0 %749
        %v753 = vsel %vm660, %v748, 0
        %755 = vmatprep.subr.mxu0 0.0
        %756 = vmatpush1.msra.mxu0 %v750
        %757 = vmatprep.subr.mxu0 0.0
        %758 = vmatpush1.msra.mxu0 0.0
        %759 = vmatprep.subr.mxu0 0.0
        %760 = vmatpush1.msra.mxu0 0.0
        %761 = vmatprep.subr.mxu0 0.0
        %762 = vmatpush1.msra.mxu0 0.0
        %763 = vmatprep.subr.mxu0 0.0
        %764 = vmatpush1.msra.mxu0 0.0
        %765 = vmatprep.subr.mxu0 0.0
        %766 = vmatpush1.msra.mxu0 0.0
        %767 = vmatprep.subr.mxu0 0.0
        %768 = vmatpush1.msra.mxu0 0.0
        %769 = vmatprep.subr.mxu0 0.0
        %770 = vmatpush1.msra.mxu0 0.0
        %771 = vmatprep.subr.mxu0 0.0
        %772 = vmatpush1.msra.mxu0 0.0
        %773 = vmatprep.subr.mxu0 0.0
        %774 = vmatpush1.msra.mxu0 0.0
        %775 = vmatprep.subr.mxu0 0.0
        %776 = vmatpush1.msra.mxu0 0.0
        %777 = vmatprep.subr.mxu0 0.0
        %778 = vmatpush1.msra.mxu0 0.0
        %779 = vmatprep.subr.mxu0 0.0
        %780 = vmatpush1.msra.mxu0 0.0
        %781 = vmatprep.subr.mxu0 0.0
        %782 = vmatpush1.msra.mxu0 0.0
        %783 = vmatprep.subr.mxu0 0.0
        %784 = vmatpush1.msra.mxu0 0.0
        %785 = vmatprep.subr.mxu0 0.0
        %786 = vmatpush1.msra.mxu0 0.0
        %787 = vmatprep.subr.mxu0 0.0
        %788 = vmatpush1.msra.mxu0 0.0
        %789 = vmatprep.subr.mxu0 0.0
        %790 = vmatpush1.msra.mxu0 0.0
        %791 = vmatprep.subr.mxu0 0.0
        %792 = vmatpush1.msra.mxu0 0.0
        %793 = vmatprep.subr.mxu0 0.0
        %794 = vmatpush1.msra.mxu0 0.0
        %795 = vmatprep.subr.mxu0 0.0
        %796 = vmatpush1.msra.mxu0 0.0
        %797 = vmatprep.subr.mxu0 0.0
        %798 = vmatpush1.msra.mxu0 0.0
        %799 = vmatprep.subr.mxu0 0.0
        %800 = vmatpush1.msra.mxu0 0.0
        %801 = vmatprep.subr.mxu0 0.0
        %802 = vmatpush1.msra.mxu0 0.0
        %803 = vmatprep.subr.mxu0 0.0
        %804 = vmatpush1.msra.mxu0 0.0
        %805 = vmatprep.subr.mxu0 0.0
        %806 = vmatpush1.msra.mxu0 0.0
        %807 = vmatprep.subr.mxu0 0.0
        %808 = vmatpush1.msra.mxu0 0.0
        %809 = vmatprep.subr.mxu0 0.0
        %810 = vmatpush1.msra.mxu0 0.0
        %811 = vmatprep.subr.mxu0 0.0
        %812 = vmatpush1.msra.mxu0 0.0
        %813 = vmatprep.subr.mxu0 0.0
        %814 = vmatpush1.msra.mxu0 0.0
        %815 = vmatprep.subr.mxu0 0.0
        %816 = vmatpush1.msra.mxu0 0.0
        %817 = vmatprep.subr.mxu0 0.0
        %818 = vmatpush1.msra.mxu0 0.0
        %819 = vmatprep.mubr.f32.mxu0 0.0
        %820 = vmatmul.mubr.f32.gmra.mrb[0].mxu0 %v753
        %v821 = vpop.f32.mrb[0].mxu0
        %v822 = vadd.f32 0.0, %v821
        %v823 = vpop.f32.mrb[0].mxu0
        %824 = vdwg.mxu0
        %v826 = vsel %vm660, %v822, 0
        %828 = vmatprep.subr.mxu0 0.0
        %829 = vmatpush1.msra.mxu0 %v645
        %830 = vmatprep.subr.mxu0 0.0
        %831 = vmatpush1.msra.mxu0 0.0
        %832 = vmatprep.subr.mxu0 0.0
        %833 = vmatpush1.msra.mxu0 0.0
        %834 = vmatprep.subr.mxu0 0.0
        %835 = vmatpush1.msra.mxu0 0.0
        %836 = vmatprep.subr.mxu0 0.0
        %837 = vmatpush1.msra.mxu0 0.0
        %838 = vmatprep.subr.mxu0 0.0
        %839 = vmatpush1.msra.mxu0 0.0
        %840 = vmatprep.subr.mxu0 0.0
        %841 = vmatpush1.msra.mxu0 0.0
        %842 = vmatprep.subr.mxu0 0.0
        %843 = vmatpush1.msra.mxu0 0.0
        %844 = vmatprep.subr.mxu0 0.0
        %845 = vmatpush1.msra.mxu0 0.0
        %846 = vmatprep.subr.mxu0 0.0
        %847 = vmatpush1.msra.mxu0 0.0
        %848 = vmatprep.subr.mxu0 0.0
        %849 = vmatpush1.msra.mxu0 0.0
        %850 = vmatprep.subr.mxu0 0.0
        %851 = vmatpush1.msra.mxu0 0.0
        %852 = vmatprep.subr.mxu0 0.0
        %853 = vmatpush1.msra.mxu0 0.0
        %854 = vmatprep.subr.mxu0 0.0
        %855 = vmatpush1.msra.mxu0 0.0
        %856 = vmatprep.subr.mxu0 0.0
        %857 = vmatpush1.msra.mxu0 0.0
        %858 = vmatprep.subr.mxu0 0.0
        %859 = vmatpush1.msra.mxu0 0.0
        %860 = vmatprep.subr.mxu0 0.0
        %861 = vmatpush1.msra.mxu0 0.0
        %862 = vmatprep.subr.mxu0 0.0
        %863 = vmatpush1.msra.mxu0 0.0
        %864 = vmatprep.subr.mxu0 0.0
        %865 = vmatpush1.msra.mxu0 0.0
        %866 = vmatprep.subr.mxu0 0.0
        %867 = vmatpush1.msra.mxu0 0.0
        %868 = vmatprep.subr.mxu0 0.0
        %869 = vmatpush1.msra.mxu0 0.0
        %870 = vmatprep.subr.mxu0 0.0
        %871 = vmatpush1.msra.mxu0 0.0
        %872 = vmatprep.subr.mxu0 0.0
        %873 = vmatpush1.msra.mxu0 0.0
        %874 = vmatprep.subr.mxu0 0.0
        %875 = vmatpush1.msra.mxu0 0.0
        %876 = vmatprep.subr.mxu0 0.0
        %877 = vmatpush1.msra.mxu0 0.0
        %878 = vmatprep.subr.mxu0 0.0
        %879 = vmatpush1.msra.mxu0 0.0
        %880 = vmatprep.subr.mxu0 0.0
        %881 = vmatpush1.msra.mxu0 0.0
        %882 = vmatprep.subr.mxu0 0.0
        %883 = vmatpush1.msra.mxu0 0.0
        %884 = vmatprep.subr.mxu0 0.0
        %885 = vmatpush1.msra.mxu0 0.0
        %886 = vmatprep.subr.mxu0 0.0
        %887 = vmatpush1.msra.mxu0 0.0
        %888 = vmatprep.subr.mxu0 0.0
        %889 = vmatpush1.msra.mxu0 0.0
        %890 = vmatprep.subr.mxu0 0.0
        %891 = vmatpush1.msra.mxu0 0.0
        %892 = vmatprep.mubr.f32.mxu0 0.0
        %893 = vmatmul.mubr.f32.gmra.mrb[0].mxu0 %v826
        %v894 = vpop.f32.mrb[0].mxu0
        %v895 = vadd.f32 0.0, %v894
        %v896 = vpop.f32.mrb[0].mxu0
        %897 = vdwg.mxu0
        %v898 = vadd.f32 %v656, %v895
        %899 = vrot.lane.b32.xlu0 %v642, 120
        %v900 = vpop.permute.xlu0 %899
        %901 = vrot.lane.b32.xlu0 %v642, 88
        %v902 = vpop.permute.xlu0 %901
        %v903 = vsel %vm660, %v900, 0
        %v905 = vsel %vm660, %v902, 0
        %907 = vmatprep.subr.mxu0 0.0
        %908 = vmatpush1.xpose.msra.mxu0 %v905
        %909 = vmatprep.subr.mxu0 0.0
        %910 = vmatpush1.xpose.msra.mxu0 0.0
        %911 = vmatprep.subr.mxu0 0.0
        %912 = vmatpush1.xpose.msra.mxu0 0.0
        %913 = vmatprep.subr.mxu0 0.0
        %914 = vmatpush1.xpose.msra.mxu0 0.0
        %915 = vmatprep.subr.mxu0 0.0
        %916 = vmatpush1.xpose.msra.mxu0 0.0
        %917 = vmatprep.subr.mxu0 0.0
        %918 = vmatpush1.xpose.msra.mxu0 0.0
        %919 = vmatprep.subr.mxu0 0.0
        %920 = vmatpush1.xpose.msra.mxu0 0.0
        %921 = vmatprep.subr.mxu0 0.0
        %922 = vmatpush1.xpose.msra.mxu0 0.0
        %923 = vmatprep.subr.mxu0 0.0
        %924 = vmatpush1.xpose.msra.mxu0 0.0
        %925 = vmatprep.subr.mxu0 0.0
        %926 = vmatpush1.xpose.msra.mxu0 0.0
        %927 = vmatprep.subr.mxu0 0.0
        %928 = vmatpush1.xpose.msra.mxu0 0.0
        %929 = vmatprep.subr.mxu0 0.0
        %930 = vmatpush1.xpose.msra.mxu0 0.0
        %931 = vmatprep.subr.mxu0 0.0
        %932 = vmatpush1.xpose.msra.mxu0 0.0
        %933 = vmatprep.subr.mxu0 0.0
        %934 = vmatpush1.xpose.msra.mxu0 0.0
        %935 = vmatprep.subr.mxu0 0.0
        %936 = vmatpush1.xpose.msra.mxu0 0.0
        %937 = vmatprep.subr.mxu0 0.0
        %938 = vmatpush1.xpose.msra.mxu0 0.0
        %939 = vmatprep.subr.mxu0 0.0
        %940 = vmatpush1.xpose.msra.mxu0 0.0
        %941 = vmatprep.subr.mxu0 0.0
        %942 = vmatpush1.xpose.msra.mxu0 0.0
        %943 = vmatprep.subr.mxu0 0.0
        %944 = vmatpush1.xpose.msra.mxu0 0.0
        %945 = vmatprep.subr.mxu0 0.0
        %946 = vmatpush1.xpose.msra.mxu0 0.0
        %947 = vmatprep.subr.mxu0 0.0
        %948 = vmatpush1.xpose.msra.mxu0 0.0
        %949 = vmatprep.subr.mxu0 0.0
        %950 = vmatpush1.xpose.msra.mxu0 0.0
        %951 = vmatprep.subr.mxu0 0.0
        %952 = vmatpush1.xpose.msra.mxu0 0.0
        %953 = vmatprep.subr.mxu0 0.0
        %954 = vmatpush1.xpose.msra.mxu0 0.0
        %955 = vmatprep.subr.mxu0 0.0
        %956 = vmatpush1.xpose.msra.mxu0 0.0
        %957 = vmatprep.subr.mxu0 0.0
        %958 = vmatpush1.xpose.msra.mxu0 0.0
        %959 = vmatprep.subr.mxu0 0.0
        %960 = vmatpush1.xpose.msra.mxu0 0.0
        %961 = vmatprep.subr.mxu0 0.0
        %962 = vmatpush1.xpose.msra.mxu0 0.0
        %963 = vmatprep.subr.mxu0 0.0
        %964 = vmatpush1.xpose.msra.mxu0 0.0
        %965 = vmatprep.subr.mxu0 0.0
        %966 = vmatpush1.xpose.msra.mxu0 0.0
        %967 = vmatprep.subr.mxu0 0.0
        %968 = vmatpush1.xpose.msra.mxu0 0.0
        %969 = vmatprep.subr.mxu0 0.0
        %970 = vmatpush1.xpose.msra.mxu0 0.0
        %971 = vmatprep.mubr.f32.mxu0 0.0
        %972 = vmatmul.mubr.f32.gmra.mrb[0].mxu0 %v903
        %v973 = vpop.f32.mrb[0].mxu0
        %v974 = vadd.f32 0.0, %v973
        %v975 = vpop.f32.mrb[0].mxu0
        %976 = vdwg.mxu0
        %v977 = vmul.f32 %v974, 0.35355338
        %v978 = vsel %vm736, -1e+09, %v977
        %v979 = vsel %vm660, %v978, -inf
        %980 = vmax.xlane.f32.xlu0 %v979
        %v981 = vpop.xlane.xlu0 %980
        %v982 = vsub.f32 %v978, %v981
        %v983 = vmul.f32 %v982, 1.442695
        %v984 = vpow.pop %v983
        %v985 = vsel %vm660, %v984, 0.0
        %986 = vadd.xlane.f32.xlu0 %v985
        %v987 = vpop.xlane.xlu0 %986
        %v988 = vrcp.pop %v987
        %v989 = vmul.f32 %v984, %v988
        %990 = vrot.lane.b32.xlu0 %v642, 56
        %v991 = vpop.permute.xlu0 %990
        %v994 = vsel %vm660, %v989, 0
        %996 = vmatprep.subr.mxu0 0.0
        %997 = vmatpush1.msra.mxu0 %v991
        %998 = vmatprep.subr.mxu0 0.0
        %999 = vmatpush1.msra.mxu0 0.0
        %1000 = vmatprep.subr.mxu0 0.0
        %1001 = vmatpush1.msra.mxu0 0.0
        %1002 = vmatprep.subr.mxu0 0.0
        %1003 = vmatpush1.msra.mxu0 0.0
        %1004 = vmatprep.subr.mxu0 0.0
        %1005 = vmatpush1.msra.mxu0 0.0
        %1006 = vmatprep.subr.mxu0 0.0
        %1007 = vmatpush1.msra.mxu0 0.0
        %1008 = vmatprep.subr.mxu0 0.0
        %1009 = vmatpush1.msra.mxu0 0.0
        %1010 = vmatprep.subr.mxu0 0.0
        %1011 = vmatpush1.msra.mxu0 0.0
        %1012 = vmatprep.subr.mxu0 0.0
        %1013 = vmatpush1.msra.mxu0 0.0
        %1014 = vmatprep.subr.mxu0 0.0
        %1015 = vmatpush1.msra.mxu0 0.0
        %1016 = vmatprep.subr.mxu0 0.0
        %1017 = vmatpush1.msra.mxu0 0.0
        %1018 = vmatprep.subr.mxu0 0.0
        %1019 = vmatpush1.msra.mxu0 0.0
        %1020 = vmatprep.subr.mxu0 0.0
        %1021 = vmatpush1.msra.mxu0 0.0
        %1022 = vmatprep.subr.mxu0 0.0
        %1023 = vmatpush1.msra.mxu0 0.0
        %1024 = vmatprep.subr.mxu0 0.0
        %1025 = vmatpush1.msra.mxu0 0.0
        %1026 = vmatprep.subr.mxu0 0.0
        %1027 = vmatpush1.msra.mxu0 0.0
        %1028 = vmatprep.subr.mxu0 0.0
        %1029 = vmatpush1.msra.mxu0 0.0
        %1030 = vmatprep.subr.mxu0 0.0
        %1031 = vmatpush1.msra.mxu0 0.0
        %1032 = vmatprep.subr.mxu0 0.0
        %1033 = vmatpush1.msra.mxu0 0.0
        %1034 = vmatprep.subr.mxu0 0.0
        %1035 = vmatpush1.msra.mxu0 0.0
        %1036 = vmatprep.subr.mxu0 0.0
        %1037 = vmatpush1.msra.mxu0 0.0
        %1038 = vmatprep.subr.mxu0 0.0
        %1039 = vmatpush1.msra.mxu0 0.0
        %1040 = vmatprep.subr.mxu0 0.0
        %1041 = vmatpush1.msra.mxu0 0.0
        %1042 = vmatprep.subr.mxu0 0.0
        %1043 = vmatpush1.msra.mxu0 0.0
        %1044 = vmatprep.subr.mxu0 0.0
        %1045 = vmatpush1.msra.mxu0 0.0
        %1046 = vmatprep.subr.mxu0 0.0
        %1047 = vmatpush1.msra.mxu0 0.0
        %1048 = vmatprep.subr.mxu0 0.0
        %1049 = vmatpush1.msra.mxu0 0.0
        %1050 = vmatprep.subr.mxu0 0.0
        %1051 = vmatpush1.msra.mxu0 0.0
        %1052 = vmatprep.subr.mxu0 0.0
        %1053 = vmatpush1.msra.mxu0 0.0
        %1054 = vmatprep.subr.mxu0 0.0
        %1055 = vmatpush1.msra.mxu0 0.0
        %1056 = vmatprep.subr.mxu0 0.0
        %1057 = vmatpush1.msra.mxu0 0.0
        %1058 = vmatprep.subr.mxu0 0.0
        %1059 = vmatpush1.msra.mxu0 0.0
        %1060 = vmatprep.mubr.f32.mxu0 0.0
        %1061 = vmatmul.mubr.f32.gmra.mrb[0].mxu0 %v994
        %v1062 = vpop.f32.mrb[0].mxu0
        %v1063 = vadd.f32 0.0, %v1062
        %v1064 = vpop.f32.mrb[0].mxu0
        %1065 = vdwg.mxu0
        %v1067 = vsel %vm660, %v1063, 0
        %1069 = vmatprep.subr.mxu0 0.0
        %1070 = vmatpush1.msra.mxu0 %v646
        %1071 = vmatprep.subr.mxu0 0.0
        %1072 = vmatpush1.msra.mxu0 0.0
        %1073 = vmatprep.subr.mxu0 0.0
        %1074 = vmatpush1.msra.mxu0 0.0
        %1075 = vmatprep.subr.mxu0 0.0
        %1076 = vmatpush1.msra.mxu0 0.0
        %1077 = vmatprep.subr.mxu0 0.0
        %1078 = vmatpush1.msra.mxu0 0.0
        %1079 = vmatprep.subr.mxu0 0.0
        %1080 = vmatpush1.msra.mxu0 0.0
        %1081 = vmatprep.subr.mxu0 0.0
        %1082 = vmatpush1.msra.mxu0 0.0
        %1083 = vmatprep.subr.mxu0 0.0
        %1084 = vmatpush1.msra.mxu0 0.0
        %1085 = vmatprep.subr.mxu0 0.0
        %1086 = vmatpush1.msra.mxu0 0.0
        %1087 = vmatprep.subr.mxu0 0.0
        %1088 = vmatpush1.msra.mxu0 0.0
        %1089 = vmatprep.subr.mxu0 0.0
        %1090 = vmatpush1.msra.mxu0 0.0
        %1091 = vmatprep.subr.mxu0 0.0
        %1092 = vmatpush1.msra.mxu0 0.0
        %1093 = vmatprep.subr.mxu0 0.0
        %1094 = vmatpush1.msra.mxu0 0.0
        %1095 = vmatprep.subr.mxu0 0.0
        %1096 = vmatpush1.msra.mxu0 0.0
        %1097 = vmatprep.subr.mxu0 0.0
        %1098 = vmatpush1.msra.mxu0 0.0
        %1099 = vmatprep.subr.mxu0 0.0
        %1100 = vmatpush1.msra.mxu0 0.0
        %1101 = vmatprep.subr.mxu0 0.0
        %1102 = vmatpush1.msra.mxu0 0.0
        %1103 = vmatprep.subr.mxu0 0.0
        %1104 = vmatpush1.msra.mxu0 0.0
        %1105 = vmatprep.subr.mxu0 0.0
        %1106 = vmatpush1.msra.mxu0 0.0
        %1107 = vmatprep.subr.mxu0 0.0
        %1108 = vmatpush1.msra.mxu0 0.0
        %1109 = vmatprep.subr.mxu0 0.0
        %1110 = vmatpush1.msra.mxu0 0.0
        %1111 = vmatprep.subr.mxu0 0.0
        %1112 = vmatpush1.msra.mxu0 0.0
        %1113 = vmatprep.subr.mxu0 0.0
        %1114 = vmatpush1.msra.mxu0 0.0
        %1115 = vmatprep.subr.mxu0 0.0
        %1116 = vmatpush1.msra.mxu0 0.0
        %1117 = vmatprep.subr.mxu0 0.0
        %1118 = vmatpush1.msra.mxu0 0.0
        %1119 = vmatprep.subr.mxu0 0.0
        %1120 = vmatpush1.msra.mxu0 0.0
        %1121 = vmatprep.subr.mxu0 0.0
        %1122 = vmatpush1.msra.mxu0 0.0
        %1123 = vmatprep.subr.mxu0 0.0
        %1124 = vmatpush1.msra.mxu0 0.0
        %1125 = vmatprep.subr.mxu0 0.0
        %1126 = vmatpush1.msra.mxu0 0.0
        %1127 = vmatprep.subr.mxu0 0.0
        %1128 = vmatpush1.msra.mxu0 0.0
        %1129 = vmatprep.subr.mxu0 0.0
        %1130 = vmatpush1.msra.mxu0 0.0
        %1131 = vmatprep.subr.mxu0 0.0
        %1132 = vmatpush1.msra.mxu0 0.0
        %1133 = vmatprep.mubr.f32.mxu0 0.0
        %1134 = vmatmul.mubr.f32.gmra.mrb[0].mxu0 %v1067
        %v1135 = vpop.f32.mrb[0].mxu0
        %v1136 = vadd.f32 0.0, %v1135
        %v1137 = vpop.f32.mrb[0].mxu0
        %1138 = vdwg.mxu0
        %v1139 = vadd.f32 %v898, %v1136
        %1140 = vrot.lane.b32.xlu0 %v642, 112
        %v1141 = vpop.permute.xlu0 %1140
        %1142 = vrot.lane.b32.xlu0 %v642, 80
        %v1143 = vpop.permute.xlu0 %1142
        %v1144 = vsel %vm660, %v1141, 0
        %v1146 = vsel %vm660, %v1143, 0
        %1148 = vmatprep.subr.mxu0 0.0
        %1149 = vmatpush1.xpose.msra.mxu0 %v1146
        %1150 = vmatprep.subr.mxu0 0.0
        %1151 = vmatpush1.xpose.msra.mxu0 0.0
        %1152 = vmatprep.subr.mxu0 0.0
        %1153 = vmatpush1.xpose.msra.mxu0 0.0
        %1154 = vmatprep.subr.mxu0 0.0
        %1155 = vmatpush1.xpose.msra.mxu0 0.0
        %1156 = vmatprep.subr.mxu0 0.0
        %1157 = vmatpush1.xpose.msra.mxu0 0.0
        %1158 = vmatprep.subr.mxu0 0.0
        %1159 = vmatpush1.xpose.msra.mxu0 0.0
        %1160 = vmatprep.subr.mxu0 0.0
        %1161 = vmatpush1.xpose.msra.mxu0 0.0
        %1162 = vmatprep.subr.mxu0 0.0
        %1163 = vmatpush1.xpose.msra.mxu0 0.0
        %1164 = vmatprep.subr.mxu0 0.0
        %1165 = vmatpush1.xpose.msra.mxu0 0.0
        %1166 = vmatprep.subr.mxu0 0.0
        %1167 = vmatpush1.xpose.msra.mxu0 0.0
        %1168 = vmatprep.subr.mxu0 0.0
        %1169 = vmatpush1.xpose.msra.mxu0 0.0
        %1170 = vmatprep.subr.mxu0 0.0
        %1171 = vmatpush1.xpose.msra.mxu0 0.0
        %1172 = vmatprep.subr.mxu0 0.0
        %1173 = vmatpush1.xpose.msra.mxu0 0.0
        %1174 = vmatprep.subr.mxu0 0.0
        %1175 = vmatpush1.xpose.msra.mxu0 0.0
        %1176 = vmatprep.subr.mxu0 0.0
        %1177 = vmatpush1.xpose.msra.mxu0 0.0
        %1178 = vmatprep.subr.mxu0 0.0
        %1179 = vmatpush1.xpose.msra.mxu0 0.0
        %1180 = vmatprep.subr.mxu0 0.0
        %1181 = vmatpush1.xpose.msra.mxu0 0.0
        %1182 = vmatprep.subr.mxu0 0.0
        %1183 = vmatpush1.xpose.msra.mxu0 0.0
        %1184 = vmatprep.subr.mxu0 0.0
        %1185 = vmatpush1.xpose.msra.mxu0 0.0
        %1186 = vmatprep.subr.mxu0 0.0
        %1187 = vmatpush1.xpose.msra.mxu0 0.0
        %1188 = vmatprep.subr.mxu0 0.0
        %1189 = vmatpush1.xpose.msra.mxu0 0.0
        %1190 = vmatprep.subr.mxu0 0.0
        %1191 = vmatpush1.xpose.msra.mxu0 0.0
        %1192 = vmatprep.subr.mxu0 0.0
        %1193 = vmatpush1.xpose.msra.mxu0 0.0
        %1194 = vmatprep.subr.mxu0 0.0
        %1195 = vmatpush1.xpose.msra.mxu0 0.0
        %1196 = vmatprep.subr.mxu0 0.0
        %1197 = vmatpush1.xpose.msra.mxu0 0.0
        %1198 = vmatprep.subr.mxu0 0.0
        %1199 = vmatpush1.xpose.msra.mxu0 0.0
        %1200 = vmatprep.subr.mxu0 0.0
        %1201 = vmatpush1.xpose.msra.mxu0 0.0
        %1202 = vmatprep.subr.mxu0 0.0
        %1203 = vmatpush1.xpose.msra.mxu0 0.0
        %1204 = vmatprep.subr.mxu0 0.0
        %1205 = vmatpush1.xpose.msra.mxu0 0.0
        %1206 = vmatprep.subr.mxu0 0.0
        %1207 = vmatpush1.xpose.msra.mxu0 0.0
        %1208 = vmatprep.subr.mxu0 0.0
        %1209 = vmatpush1.xpose.msra.mxu0 0.0
        %1210 = vmatprep.subr.mxu0 0.0
        %1211 = vmatpush1.xpose.msra.mxu0 0.0
        %1212 = vmatprep.mubr.f32.mxu0 0.0
        %1213 = vmatmul.mubr.f32.gmra.mrb[0].mxu0 %v1144
        %v1214 = vpop.f32.mrb[0].mxu0
        %v1215 = vadd.f32 0.0, %v1214
        %v1216 = vpop.f32.mrb[0].mxu0
        %1217 = vdwg.mxu0
        %v1218 = vmul.f32 %v1215, 0.35355338
        %v1219 = vsel %vm736, -1e+09, %v1218
        %v1220 = vsel %vm660, %v1219, -inf
        %1221 = vmax.xlane.f32.xlu0 %v1220
        %v1222 = vpop.xlane.xlu0 %1221
        %v1223 = vsub.f32 %v1219, %v1222
        %v1224 = vmul.f32 %v1223, 1.442695
        %v1225 = vpow.pop %v1224
        %v1226 = vsel %vm660, %v1225, 0.0
        %1227 = vadd.xlane.f32.xlu0 %v1226
        %v1228 = vpop.xlane.xlu0 %1227
        %v1229 = vrcp.pop %v1228
        %v1230 = vmul.f32 %v1225, %v1229
        %1231 = vrot.lane.b32.xlu0 %v642, 48
        %v1232 = vpop.permute.xlu0 %1231
        %v1235 = vsel %vm660, %v1230, 0
        %1237 = vmatprep.subr.mxu0 0.0
        %1238 = vmatpush1.msra.mxu0 %v1232
        %1239 = vmatprep.subr.mxu0 0.0
        %1240 = vmatpush1.msra.mxu0 0.0
        %1241 = vmatprep.subr.mxu0 0.0
        %1242 = vmatpush1.msra.mxu0 0.0
        %1243 = vmatprep.subr.mxu0 0.0
        %1244 = vmatpush1.msra.mxu0 0.0
        %1245 = vmatprep.subr.mxu0 0.0
        %1246 = vmatpush1.msra.mxu0 0.0
        %1247 = vmatprep.subr.mxu0 0.0
        %1248 = vmatpush1.msra.mxu0 0.0
        %1249 = vmatprep.subr.mxu0 0.0
        %1250 = vmatpush1.msra.mxu0 0.0
        %1251 = vmatprep.subr.mxu0 0.0
        %1252 = vmatpush1.msra.mxu0 0.0
        %1253 = vmatprep.subr.mxu0 0.0
        %1254 = vmatpush1.msra.mxu0 0.0
        %1255 = vmatprep.subr.mxu0 0.0
        %1256 = vmatpush1.msra.mxu0 0.0
        %1257 = vmatprep.subr.mxu0 0.0
        %1258 = vmatpush1.msra.mxu0 0.0
        %1259 = vmatprep.subr.mxu0 0.0
        %1260 = vmatpush1.msra.mxu0 0.0
        %1261 = vmatprep.subr.mxu0 0.0
        %1262 = vmatpush1.msra.mxu0 0.0
        %1263 = vmatprep.subr.mxu0 0.0
        %1264 = vmatpush1.msra.mxu0 0.0
        %1265 = vmatprep.subr.mxu0 0.0
        %1266 = vmatpush1.msra.mxu0 0.0
        %1267 = vmatprep.subr.mxu0 0.0
        %1268 = vmatpush1.msra.mxu0 0.0
        %1269 = vmatprep.subr.mxu0 0.0
        %1270 = vmatpush1.msra.mxu0 0.0
        %1271 = vmatprep.subr.mxu0 0.0
        %1272 = vmatpush1.msra.mxu0 0.0
        %1273 = vmatprep.subr.mxu0 0.0
        %1274 = vmatpush1.msra.mxu0 0.0
        %1275 = vmatprep.subr.mxu0 0.0
        %1276 = vmatpush1.msra.mxu0 0.0
        %1277 = vmatprep.subr.mxu0 0.0
        %1278 = vmatpush1.msra.mxu0 0.0
        %1279 = vmatprep.subr.mxu0 0.0
        %1280 = vmatpush1.msra.mxu0 0.0
        %1281 = vmatprep.subr.mxu0 0.0
        %1282 = vmatpush1.msra.mxu0 0.0
        %1283 = vmatprep.subr.mxu0 0.0
        %1284 = vmatpush1.msra.mxu0 0.0
        %1285 = vmatprep.subr.mxu0 0.0
        %1286 = vmatpush1.msra.mxu0 0.0
        %1287 = vmatprep.subr.mxu0 0.0
        %1288 = vmatpush1.msra.mxu0 0.0
        %1289 = vmatprep.subr.mxu0 0.0
        %1290 = vmatpush1.msra.mxu0 0.0
        %1291 = vmatprep.subr.mxu0 0.0
        %1292 = vmatpush1.msra.mxu0 0.0
        %1293 = vmatprep.subr.mxu0 0.0
        %1294 = vmatpush1.msra.mxu0 0.0
        %1295 = vmatprep.subr.mxu0 0.0
        %1296 = vmatpush1.msra.mxu0 0.0
        %1297 = vmatprep.subr.mxu0 0.0
        %1298 = vmatpush1.msra.mxu0 0.0
        %1299 = vmatprep.subr.mxu0 0.0
        %1300 = vmatpush1.msra.mxu0 0.0
        %1301 = vmatprep.mubr.f32.mxu0 0.0
        %1302 = vmatmul.mubr.f32.gmra.mrb[0].mxu0 %v1235
        %v1303 = vpop.f32.mrb[0].mxu0
        %v1304 = vadd.f32 0.0, %v1303
        %v1305 = vpop.f32.mrb[0].mxu0
        %1306 = vdwg.mxu0
        %v1308 = vsel %vm660, %v1304, 0
        %1310 = vmatprep.subr.mxu0 0.0
        %1311 = vmatpush1.msra.mxu0 %v647
        %1312 = vmatprep.subr.mxu0 0.0
        %1313 = vmatpush1.msra.mxu0 0.0
        %1314 = vmatprep.subr.mxu0 0.0
        %1315 = vmatpush1.msra.mxu0 0.0
        %1316 = vmatprep.subr.mxu0 0.0
        %1317 = vmatpush1.msra.mxu0 0.0
        %1318 = vmatprep.subr.mxu0 0.0
        %1319 = vmatpush1.msra.mxu0 0.0
        %1320 = vmatprep.subr.mxu0 0.0
        %1321 = vmatpush1.msra.mxu0 0.0
        %1322 = vmatprep.subr.mxu0 0.0
        %1323 = vmatpush1.msra.mxu0 0.0
        %1324 = vmatprep.subr.mxu0 0.0
        %1325 = vmatpush1.msra.mxu0 0.0
        %1326 = vmatprep.subr.mxu0 0.0
        %1327 = vmatpush1.msra.mxu0 0.0
        %1328 = vmatprep.subr.mxu0 0.0
        %1329 = vmatpush1.msra.mxu0 0.0
        %1330 = vmatprep.subr.mxu0 0.0
        %1331 = vmatpush1.msra.mxu0 0.0
        %1332 = vmatprep.subr.mxu0 0.0
        %1333 = vmatpush1.msra.mxu0 0.0
        %1334 = vmatprep.subr.mxu0 0.0
        %1335 = vmatpush1.msra.mxu0 0.0
        %1336 = vmatprep.subr.mxu0 0.0
        %1337 = vmatpush1.msra.mxu0 0.0
        %1338 = vmatprep.subr.mxu0 0.0
        %1339 = vmatpush1.msra.mxu0 0.0
        %1340 = vmatprep.subr.mxu0 0.0
        %1341 = vmatpush1.msra.mxu0 0.0
        %1342 = vmatprep.subr.mxu0 0.0
        %1343 = vmatpush1.msra.mxu0 0.0
        %1344 = vmatprep.subr.mxu0 0.0
        %1345 = vmatpush1.msra.mxu0 0.0
        %1346 = vmatprep.subr.mxu0 0.0
        %1347 = vmatpush1.msra.mxu0 0.0
        %1348 = vmatprep.subr.mxu0 0.0
        %1349 = vmatpush1.msra.mxu0 0.0
        %1350 = vmatprep.subr.mxu0 0.0
        %1351 = vmatpush1.msra.mxu0 0.0
        %1352 = vmatprep.subr.mxu0 0.0
        %1353 = vmatpush1.msra.mxu0 0.0
        %1354 = vmatprep.subr.mxu0 0.0
        %1355 = vmatpush1.msra.mxu0 0.0
        %1356 = vmatprep.subr.mxu0 0.0
        %1357 = vmatpush1.msra.mxu0 0.0
        %1358 = vmatprep.subr.mxu0 0.0
        %1359 = vmatpush1.msra.mxu0 0.0
        %1360 = vmatprep.subr.mxu0 0.0
        %1361 = vmatpush1.msra.mxu0 0.0
        %1362 = vmatprep.subr.mxu0 0.0
        %1363 = vmatpush1.msra.mxu0 0.0
        %1364 = vmatprep.subr.mxu0 0.0
        %1365 = vmatpush1.msra.mxu0 0.0
        %1366 = vmatprep.subr.mxu0 0.0
        %1367 = vmatpush1.msra.mxu0 0.0
        %1368 = vmatprep.subr.mxu0 0.0
        %1369 = vmatpush1.msra.mxu0 0.0
        %1370 = vmatprep.subr.mxu0 0.0
        %1371 = vmatpush1.msra.mxu0 0.0
        %1372 = vmatprep.subr.mxu0 0.0
        %1373 = vmatpush1.msra.mxu0 0.0
        %1374 = vmatprep.mubr.f32.mxu0 0.0
        %1375 = vmatmul.mubr.f32.gmra.mrb[0].mxu0 %v1308
        %v1376 = vpop.f32.mrb[0].mxu0
        %v1377 = vadd.f32 0.0, %v1376
        %v1378 = vpop.f32.mrb[0].mxu0
        %1379 = vdwg.mxu0
        %v1380 = vadd.f32 %v1139, %v1377
        %1381 = vrot.lane.b32.xlu0 %v642, 104
        %v1382 = vpop.permute.xlu0 %1381
        %1383 = vrot.lane.b32.xlu0 %v642, 72
        %v1384 = vpop.permute.xlu0 %1383
        %v1385 = vsel %vm660, %v1382, 0
        %v1387 = vsel %vm660, %v1384, 0
        %1389 = vmatprep.subr.mxu0 0.0
        %1390 = vmatpush1.xpose.msra.mxu0 %v1387
        %1391 = vmatprep.subr.mxu0 0.0
        %1392 = vmatpush1.xpose.msra.mxu0 0.0
        %1393 = vmatprep.subr.mxu0 0.0
        %1394 = vmatpush1.xpose.msra.mxu0 0.0
        %1395 = vmatprep.subr.mxu0 0.0
        %1396 = vmatpush1.xpose.msra.mxu0 0.0
        %1397 = vmatprep.subr.mxu0 0.0
        %1398 = vmatpush1.xpose.msra.mxu0 0.0
        %1399 = vmatprep.subr.mxu0 0.0
        %1400 = vmatpush1.xpose.msra.mxu0 0.0
        %1401 = vmatprep.subr.mxu0 0.0
        %1402 = vmatpush1.xpose.msra.mxu0 0.0
        %1403 = vmatprep.subr.mxu0 0.0
        %1404 = vmatpush1.xpose.msra.mxu0 0.0
        %1405 = vmatprep.subr.mxu0 0.0
        %1406 = vmatpush1.xpose.msra.mxu0 0.0
        %1407 = vmatprep.subr.mxu0 0.0
        %1408 = vmatpush1.xpose.msra.mxu0 0.0
        %1409 = vmatprep.subr.mxu0 0.0
        %1410 = vmatpush1.xpose.msra.mxu0 0.0
        %1411 = vmatprep.subr.mxu0 0.0
        %1412 = vmatpush1.xpose.msra.mxu0 0.0
        %1413 = vmatprep.subr.mxu0 0.0
        %1414 = vmatpush1.xpose.msra.mxu0 0.0
        %1415 = vmatprep.subr.mxu0 0.0
        %1416 = vmatpush1.xpose.msra.mxu0 0.0
        %1417 = vmatprep.subr.mxu0 0.0
        %1418 = vmatpush1.xpose.msra.mxu0 0.0
        %1419 = vmatprep.subr.mxu0 0.0
        %1420 = vmatpush1.xpose.msra.mxu0 0.0
        %1421 = vmatprep.subr.mxu0 0.0
        %1422 = vmatpush1.xpose.msra.mxu0 0.0
        %1423 = vmatprep.subr.mxu0 0.0
        %1424 = vmatpush1.xpose.msra.mxu0 0.0
        %1425 = vmatprep.subr.mxu0 0.0
        %1426 = vmatpush1.xpose.msra.mxu0 0.0
        %1427 = vmatprep.subr.mxu0 0.0
        %1428 = vmatpush1.xpose.msra.mxu0 0.0
        %1429 = vmatprep.subr.mxu0 0.0
        %1430 = vmatpush1.xpose.msra.mxu0 0.0
        %1431 = vmatprep.subr.mxu0 0.0
        %1432 = vmatpush1.xpose.msra.mxu0 0.0
        %1433 = vmatprep.subr.mxu0 0.0
        %1434 = vmatpush1.xpose.msra.mxu0 0.0
        %1435 = vmatprep.subr.mxu0 0.0
        %1436 = vmatpush1.xpose.msra.mxu0 0.0
        %1437 = vmatprep.subr.mxu0 0.0
        %1438 = vmatpush1.xpose.msra.mxu0 0.0
        %1439 = vmatprep.subr.mxu0 0.0
        %1440 = vmatpush1.xpose.msra.mxu0 0.0
        %1441 = vmatprep.subr.mxu0 0.0
        %1442 = vmatpush1.xpose.msra.mxu0 0.0
        %1443 = vmatprep.subr.mxu0 0.0
        %1444 = vmatpush1.xpose.msra.mxu0 0.0
        %1445 = vmatprep.subr.mxu0 0.0
        %1446 = vmatpush1.xpose.msra.mxu0 0.0
        %1447 = vmatprep.subr.mxu0 0.0
        %1448 = vmatpush1.xpose.msra.mxu0 0.0
        %1449 = vmatprep.subr.mxu0 0.0
        %1450 = vmatpush1.xpose.msra.mxu0 0.0
        %1451 = vmatprep.subr.mxu0 0.0
        %1452 = vmatpush1.xpose.msra.mxu0 0.0
        %1453 = vmatprep.mubr.f32.mxu0 0.0
        %1454 = vmatmul.mubr.f32.gmra.mrb[0].mxu0 %v1385
        %v1455 = vpop.f32.mrb[0].mxu0
        %v1456 = vadd.f32 0.0, %v1455
        %v1457 = vpop.f32.mrb[0].mxu0
        %1458 = vdwg.mxu0
        %v1459 = vmul.f32 %v1456, 0.35355338
        %v1460 = vsel %vm736, -1e+09, %v1459
        %v1461 = vsel %vm660, %v1460, -inf
        %1462 = vmax.xlane.f32.xlu0 %v1461
        %v1463 = vpop.xlane.xlu0 %1462
        %v1464 = vsub.f32 %v1460, %v1463
        %v1465 = vmul.f32 %v1464, 1.442695
        %v1466 = vpow.pop %v1465
        %v1467 = vsel %vm660, %v1466, 0.0
        %1468 = vadd.xlane.f32.xlu0 %v1467
        %v1469 = vpop.xlane.xlu0 %1468
        %v1470 = vrcp.pop %v1469
        %v1471 = vmul.f32 %v1466, %v1470
        %1472 = vrot.lane.b32.xlu0 %v642, 40
        %v1473 = vpop.permute.xlu0 %1472
        %v1476 = vsel %vm660, %v1471, 0
        %1478 = vmatprep.subr.mxu0 0.0
        %1479 = vmatpush1.msra.mxu0 %v1473
        %1480 = vmatprep.subr.mxu0 0.0
        %1481 = vmatpush1.msra.mxu0 0.0
        %1482 = vmatprep.subr.mxu0 0.0
        %1483 = vmatpush1.msra.mxu0 0.0
        %1484 = vmatprep.subr.mxu0 0.0
        %1485 = vmatpush1.msra.mxu0 0.0
        %1486 = vmatprep.subr.mxu0 0.0
        %1487 = vmatpush1.msra.mxu0 0.0
        %1488 = vmatprep.subr.mxu0 0.0
        %1489 = vmatpush1.msra.mxu0 0.0
        %1490 = vmatprep.subr.mxu0 0.0
        %1491 = vmatpush1.msra.mxu0 0.0
        %1492 = vmatprep.subr.mxu0 0.0
        %1493 = vmatpush1.msra.mxu0 0.0
        %1494 = vmatprep.subr.mxu0 0.0
        %1495 = vmatpush1.msra.mxu0 0.0
        %1496 = vmatprep.subr.mxu0 0.0
        %1497 = vmatpush1.msra.mxu0 0.0
        %1498 = vmatprep.subr.mxu0 0.0
        %1499 = vmatpush1.msra.mxu0 0.0
        %1500 = vmatprep.subr.mxu0 0.0
        %1501 = vmatpush1.msra.mxu0 0.0
        %1502 = vmatprep.subr.mxu0 0.0
        %1503 = vmatpush1.msra.mxu0 0.0
        %1504 = vmatprep.subr.mxu0 0.0
        %1505 = vmatpush1.msra.mxu0 0.0
        %1506 = vmatprep.subr.mxu0 0.0
        %1507 = vmatpush1.msra.mxu0 0.0
        %1508 = vmatprep.subr.mxu0 0.0
        %1509 = vmatpush1.msra.mxu0 0.0
        %1510 = vmatprep.subr.mxu0 0.0
        %1511 = vmatpush1.msra.mxu0 0.0
        %1512 = vmatprep.subr.mxu0 0.0
        %1513 = vmatpush1.msra.mxu0 0.0
        %1514 = vmatprep.subr.mxu0 0.0
        %1515 = vmatpush1.msra.mxu0 0.0
        %1516 = vmatprep.subr.mxu0 0.0
        %1517 = vmatpush1.msra.mxu0 0.0
        %1518 = vmatprep.subr.mxu0 0.0
        %1519 = vmatpush1.msra.mxu0 0.0
        %1520 = vmatprep.subr.mxu0 0.0
        %1521 = vmatpush1.msra.mxu0 0.0
        %1522 = vmatprep.subr.mxu0 0.0
        %1523 = vmatpush1.msra.mxu0 0.0
        %1524 = vmatprep.subr.mxu0 0.0
        %1525 = vmatpush1.msra.mxu0 0.0
        %1526 = vmatprep.subr.mxu0 0.0
        %1527 = vmatpush1.msra.mxu0 0.0
        %1528 = vmatprep.subr.mxu0 0.0
        %1529 = vmatpush1.msra.mxu0 0.0
        %1530 = vmatprep.subr.mxu0 0.0
        %1531 = vmatpush1.msra.mxu0 0.0
        %1532 = vmatprep.subr.mxu0 0.0
        %1533 = vmatpush1.msra.mxu0 0.0
        %1534 = vmatprep.subr.mxu0 0.0
        %1535 = vmatpush1.msra.mxu0 0.0
        %1536 = vmatprep.subr.mxu0 0.0
        %1537 = vmatpush1.msra.mxu0 0.0
        %1538 = vmatprep.subr.mxu0 0.0
        %1539 = vmatpush1.msra.mxu0 0.0
        %1540 = vmatprep.subr.mxu0 0.0
        %1541 = vmatpush1.msra.mxu0 0.0
        %1542 = vmatprep.mubr.f32.mxu0 0.0
        %1543 = vmatmul.mubr.f32.gmra.mrb[0].mxu0 %v1476
        %v1544 = vpop.f32.mrb[0].mxu0
        %v1545 = vadd.f32 0.0, %v1544
        %v1546 = vpop.f32.mrb[0].mxu0
        %1547 = vdwg.mxu0
        %v1549 = vsel %vm660, %v1545, 0
        %1551 = vmatprep.subr.mxu0 0.0
        %1552 = vmatpush1.msra.mxu0 %v648
        %1553 = vmatprep.subr.mxu0 0.0
        %1554 = vmatpush1.msra.mxu0 0.0
        %1555 = vmatprep.subr.mxu0 0.0
        %1556 = vmatpush1.msra.mxu0 0.0
        %1557 = vmatprep.subr.mxu0 0.0
        %1558 = vmatpush1.msra.mxu0 0.0
        %1559 = vmatprep.subr.mxu0 0.0
        %1560 = vmatpush1.msra.mxu0 0.0
        %1561 = vmatprep.subr.mxu0 0.0
        %1562 = vmatpush1.msra.mxu0 0.0
        %1563 = vmatprep.subr.mxu0 0.0
        %1564 = vmatpush1.msra.mxu0 0.0
        %1565 = vmatprep.subr.mxu0 0.0
        %1566 = vmatpush1.msra.mxu0 0.0
        %1567 = vmatprep.subr.mxu0 0.0
        %1568 = vmatpush1.msra.mxu0 0.0
        %1569 = vmatprep.subr.mxu0 0.0
        %1570 = vmatpush1.msra.mxu0 0.0
        %1571 = vmatprep.subr.mxu0 0.0
        %1572 = vmatpush1.msra.mxu0 0.0
        %1573 = vmatprep.subr.mxu0 0.0
        %1574 = vmatpush1.msra.mxu0 0.0
        %1575 = vmatprep.subr.mxu0 0.0
        %1576 = vmatpush1.msra.mxu0 0.0
        %1577 = vmatprep.subr.mxu0 0.0
        %1578 = vmatpush1.msra.mxu0 0.0
        %1579 = vmatprep.subr.mxu0 0.0
        %1580 = vmatpush1.msra.mxu0 0.0
        %1581 = vmatprep.subr.mxu0 0.0
        %1582 = vmatpush1.msra.mxu0 0.0
        %1583 = vmatprep.subr.mxu0 0.0
        %1584 = vmatpush1.msra.mxu0 0.0
        %1585 = vmatprep.subr.mxu0 0.0
        %1586 = vmatpush1.msra.mxu0 0.0
        %1587 = vmatprep.subr.mxu0 0.0
        %1588 = vmatpush1.msra.mxu0 0.0
        %1589 = vmatprep.subr.mxu0 0.0
        %1590 = vmatpush1.msra.mxu0 0.0
        %1591 = vmatprep.subr.mxu0 0.0
        %1592 = vmatpush1.msra.mxu0 0.0
        %1593 = vmatprep.subr.mxu0 0.0
        %1594 = vmatpush1.msra.mxu0 0.0
        %1595 = vmatprep.subr.mxu0 0.0
        %1596 = vmatpush1.msra.mxu0 0.0
        %1597 = vmatprep.subr.mxu0 0.0
        %1598 = vmatpush1.msra.mxu0 0.0
        %1599 = vmatprep.subr.mxu0 0.0
        %1600 = vmatpush1.msra.mxu0 0.0
        %1601 = vmatprep.subr.mxu0 0.0
        %1602 = vmatpush1.msra.mxu0 0.0
        %1603 = vmatprep.subr.mxu0 0.0
        %1604 = vmatpush1.msra.mxu0 0.0
        %1605 = vmatprep.subr.mxu0 0.0
        %1606 = vmatpush1.msra.mxu0 0.0
        %1607 = vmatprep.subr.mxu0 0.0
        %1608 = vmatpush1.msra.mxu0 0.0
        %1609 = vmatprep.subr.mxu0 0.0
        %1610 = vmatpush1.msra.mxu0 0.0
        %1611 = vmatprep.subr.mxu0 0.0
        %1612 = vmatpush1.msra.mxu0 0.0
        %1613 = vmatprep.subr.mxu0 0.0
        %1614 = vmatpush1.msra.mxu0 0.0
        %1615 = vmatprep.mubr.f32.mxu0 0.0
        %1616 = vmatmul.mubr.f32.gmra.mrb[0].mxu0 %v1549
        %v1617 = vpop.f32.mrb[0].mxu0
        %v1618 = vadd.f32 0.0, %v1617
        %v1619 = vpop.f32.mrb[0].mxu0
        %1620 = vdwg.mxu0
        %v1621 = vadd.f32 %v1380, %v1618
        %v1622 = vadd.f32 %v520, %v1621
        %v1623 = vld [vmem:[%s8] sm:$0x1]
        %v1624 = vld [vmem:[%s9] sm:$0x1]
        %v1625 = vsel %vm524, %v1622, 0.0
        %1626 = vadd.xlane.f32.xlu0 %v1625
        %v1627 = vpop.xlane.xlu0 %1626
        %v1628 = vmul.f32 %v1627, %v528
        %v1629 = vsub.f32 %v1622, %v1628
        %v1630 = vmul.f32 %v1629, %v1629
        %v1631 = vsel %vm524, %v1630, 0.0
        %1632 = vadd.xlane.f32.xlu0 %v1631
        %v1633 = vpop.xlane.xlu0 %1632
        %v1634 = vmul.f32 %v1633, %v535
        %v1635 = vrsqrt.pop %v1634
        %v1636 = vmul.f32 %v1634, %v1635
        %vm1637 = vcmp.eq.f32.partialorder %v1634, inf
        %v1638 = vsel %vm1637, %v1634, %v1636
        %vm1639 = vcmp.eq.f32.partialorder %v1634, 0.0
        %v1640 = vand.u32 %v1634, 2147483648
        %v1641 = vsel %vm1639, %v1640, %v1638
        %v1643 = vlaneseq
        %v1644 = vshrl.u32 %v1643, 7
        %v1645 = vsub.s32 0, %v1644
        %v1646 = vrot.slane %v1623, %v1645
        %v1648 = vmul.f32 %v1646, %v1629
        %v1649 = vadd.f32 %v1641, 1e-06
        %v1650 = vrcp.pop %v1649
        %v1651 = vmul.f32 %v1648, %v1650
        %v1653 = vlaneseq
        %v1654 = vshrl.u32 %v1653, 7
        %v1655 = vsub.s32 0, %v1654
        %v1656 = vrot.slane %v1624, %v1655
        %v1658 = vadd.f32 %v1651, %v1656
        %v1659 = vld [vmem:[%s10] sm:$0xff]
        %v1660 = vld [vmem:[%s10 + $0x8] sm:$0xff]
        %v1661 = vld [vmem:[%s10 + $0x10] sm:$0xff]
        %v1662 = vld [vmem:[%s10 + $0x18] sm:$0xff]
        %v1663 = vld [vmem:[%s11] sm:$0x1]
        %v1665 = vlaneseq
        %v1666 = vshrl.u32 %v1665, 7
        %v1667 = vsub.s32 0, %v1666
        %v1668 = vrot.slane %v1663, %v1667
        %v1671 = vsel %vm524, %v1658, 0
        %1673 = vmatprep.subr.mxu0 0.0
        %1674 = vmatpush1.msra.mxu0 %v1659
        %1675 = vmatprep.subr.mxu0 0.0
        %1676 = vmatpush1.msra.mxu0 %v1660
        %1677 = vmatprep.subr.mxu0 0.0
        %1678 = vmatpush1.msra.mxu0 %v1661
        %1679 = vmatprep.subr.mxu0 0.0
        %1680 = vmatpush1.msra.mxu0 %v1662
        %1681 = vmatprep.subr.mxu0 0.0
        %1682 = vmatpush1.msra.mxu0 0.0
        %1683 = vmatprep.subr.mxu0 0.0
        %1684 = vmatpush1.msra.mxu0 0.0
        %1685 = vmatprep.subr.mxu0 0.0
        %1686 = vmatpush1.msra.mxu0 0.0
        %1687 = vmatprep.subr.mxu0 0.0
        %1688 = vmatpush1.msra.mxu0 0.0
        %1689 = vmatprep.subr.mxu0 0.0
        %1690 = vmatpush1.msra.mxu0 0.0
        %1691 = vmatprep.subr.mxu0 0.0
        %1692 = vmatpush1.msra.mxu0 0.0
        %1693 = vmatprep.subr.mxu0 0.0
        %1694 = vmatpush1.msra.mxu0 0.0
        %1695 = vmatprep.subr.mxu0 0.0
        %1696 = vmatpush1.msra.mxu0 0.0
        %1697 = vmatprep.subr.mxu0 0.0
        %1698 = vmatpush1.msra.mxu0 0.0
        %1699 = vmatprep.subr.mxu0 0.0
        %1700 = vmatpush1.msra.mxu0 0.0
        %1701 = vmatprep.subr.mxu0 0.0
        %1702 = vmatpush1.msra.mxu0 0.0
        %1703 = vmatprep.subr.mxu0 0.0
        %1704 = vmatpush1.msra.mxu0 0.0
        %1705 = vmatprep.subr.mxu0 0.0
        %1706 = vmatpush1.msra.mxu0 0.0
        %1707 = vmatprep.subr.mxu0 0.0
        %1708 = vmatpush1.msra.mxu0 0.0
        %1709 = vmatprep.subr.mxu0 0.0
        %1710 = vmatpush1.msra.mxu0 0.0
        %1711 = vmatprep.subr.mxu0 0.0
        %1712 = vmatpush1.msra.mxu0 0.0
        %1713 = vmatprep.subr.mxu0 0.0
        %1714 = vmatpush1.msra.mxu0 0.0
        %1715 = vmatprep.subr.mxu0 0.0
        %1716 = vmatpush1.msra.mxu0 0.0
        %1717 = vmatprep.subr.mxu0 0.0
        %1718 = vmatpush1.msra.mxu0 0.0
        %1719 = vmatprep.subr.mxu0 0.0
        %1720 = vmatpush1.msra.mxu0 0.0
        %1721 = vmatprep.subr.mxu0 0.0
        %1722 = vmatpush1.msra.mxu0 0.0
        %1723 = vmatprep.subr.mxu0 0.0
        %1724 = vmatpush1.msra.mxu0 0.0
        %1725 = vmatprep.subr.mxu0 0.0
        %1726 = vmatpush1.msra.mxu0 0.0
        %1727 = vmatprep.subr.mxu0 0.0
        %1728 = vmatpush1.msra.mxu0 0.0
        %1729 = vmatprep.subr.mxu0 0.0
        %1730 = vmatpush1.msra.mxu0 0.0
        %1731 = vmatprep.subr.mxu0 0.0
        %1732 = vmatpush1.msra.mxu0 0.0
        %1733 = vmatprep.subr.mxu0 0.0
        %1734 = vmatpush1.msra.mxu0 0.0
        %1735 = vmatprep.subr.mxu0 0.0
        %1736 = vmatpush1.msra.mxu0 0.0
        %1737 = vmatprep.mubr.f32.mxu0 0.0
        %1738 = vmatmul.mubr.f32.gmra.mrb[0].mxu0 %v1671
        %v1739 = vpop.f32.mrb[0].mxu0
        %v1740 = vadd.f32 %v1668, %v1739
        %v1741 = vpop.f32.mrb[0].mxu0
        %1742 = vdwg.mxu0
        %v1743 = vmul.f32 %v1740, 0.5
        %v1744 = vmul.f32 %v1740, 0.70710677
        %vm1745 = vcmp.ge.f32.partialorder %v1744, 0.0
        %v1746 = vsel %vm1745, 1.0, -1.0
        %v1747 = vand.u32 2147483647, %v1744
        %v1748 = vmul.f32 %v1747, 0.3275911
        %v1749 = vadd.f32 %v1748, 1.0
        %v1750 = vrcp.pop %v1749
        %v1751 = vmul.f32 1.0, %v1750
        %v1752 = vmul.f32 %v1751, 1.0614054
        %v1753 = vadd.f32 %v1752, -1.4531521
        %v1754 = vmul.f32 %v1753, %v1751
        %v1755 = vadd.f32 %v1754, 1.4214138
        %v1756 = vmul.f32 %v1755, %v1751
        %v1757 = vadd.f32 %v1756, -0.28449672
        %v1758 = vmul.f32 %v1757, %v1751
        %v1759 = vadd.f32 %v1758, 0.2548296
        %v1760 = vmul.f32 %v1759, %v1751
        %v1761 = vsub.f32 0.0, %v1747
        %v1762 = vmul.f32 %v1761, %v1747
        %v1763 = vmul.f32 %v1762, 1.442695
        %v1764 = vpow.pop %v1763
        %v1765 = vmul.f32 %v1760, %v1764
        %v1766 = vsub.f32 1.0, %v1765
        %v1767 = vmul.f32 %v1746, %v1766
        %v1768 = vadd.f32 %v1767, 1.0
        %v1769 = vmul.f32 %v1743, %v1768
        %v1770 = vld [vmem:[%s12] sm:$0xff]
        %v1771 = vld [vmem:[%s12 + $0x8] sm:$0xff]
        %v1772 = vld [vmem:[%s12 + $0x10] sm:$0xff]
        %v1773 = vld [vmem:[%s12 + $0x18] sm:$0xff]
        %v1774 = vld [vmem:[%s12 + $0x20] sm:$0xff]
        %v1775 = vld [vmem:[%s12 + $0x28] sm:$0xff]
        %v1776 = vld [vmem:[%s12 + $0x30] sm:$0xff]
        %v1777 = vld [vmem:[%s12 + $0x38] sm:$0xff]
        %vm1778 = vcmask 523264
        %v1780 = vsel %vm1778, %v1769, 0
        %1782 = vmatprep.subr.mxu0 0.0
        %1783 = vmatpush1.msra.mxu0 %v1770
        %1784 = vmatprep.subr.mxu0 0.0
        %1785 = vmatpush1.msra.mxu0 %v1771
        %1786 = vmatprep.subr.mxu0 0.0
        %1787 = vmatpush1.msra.mxu0 %v1772
        %1788 = vmatprep.subr.mxu0 0.0
        %1789 = vmatpush1.msra.mxu0 %v1773
        %1790 = vmatprep.subr.mxu0 0.0
        %1791 = vmatpush1.msra.mxu0 %v1774
        %1792 = vmatprep.subr.mxu0 0.0
        %1793 = vmatpush1.msra.mxu0 %v1775
        %1794 = vmatprep.subr.mxu0 0.0
        %1795 = vmatpush1.msra.mxu0 %v1776
        %1796 = vmatprep.subr.mxu0 0.0
        %1797 = vmatpush1.msra.mxu0 %v1777
        %1798 = vmatprep.subr.mxu0 0.0
        %1799 = vmatpush1.msra.mxu0 0.0
        %1800 = vmatprep.subr.mxu0 0.0
        %1801 = vmatpush1.msra.mxu0 0.0
        %1802 = vmatprep.subr.mxu0 0.0
        %1803 = vmatpush1.msra.mxu0 0.0
        %1804 = vmatprep.subr.mxu0 0.0
        %1805 = vmatpush1.msra.mxu0 0.0
        %1806 = vmatprep.subr.mxu0 0.0
        %1807 = vmatpush1.msra.mxu0 0.0
        %1808 = vmatprep.subr.mxu0 0.0
        %1809 = vmatpush1.msra.mxu0 0.0
        %1810 = vmatprep.subr.mxu0 0.0
        %1811 = vmatpush1.msra.mxu0 0.0
        %1812 = vmatprep.subr.mxu0 0.0
        %1813 = vmatpush1.msra.mxu0 0.0
        %1814 = vmatprep.subr.mxu0 0.0
        %1815 = vmatpush1.msra.mxu0 0.0
        %1816 = vmatprep.subr.mxu0 0.0
        %1817 = vmatpush1.msra.mxu0 0.0
        %1818 = vmatprep.subr.mxu0 0.0
        %1819 = vmatpush1.msra.mxu0 0.0
        %1820 = vmatprep.subr.mxu0 0.0
        %1821 = vmatpush1.msra.mxu0 0.0
        %1822 = vmatprep.subr.mxu0 0.0
        %1823 = vmatpush1.msra.mxu0 0.0
        %1824 = vmatprep.subr.mxu0 0.0
        %1825 = vmatpush1.msra.mxu0 0.0
        %1826 = vmatprep.subr.mxu0 0.0
        %1827 = vmatpush1.msra.mxu0 0.0
        %1828 = vmatprep.subr.mxu0 0.0
        %1829 = vmatpush1.msra.mxu0 0.0
        %1830 = vmatprep.subr.mxu0 0.0
        %1831 = vmatpush1.msra.mxu0 0.0
        %1832 = vmatprep.subr.mxu0 0.0
        %1833 = vmatpush1.msra.mxu0 0.0
        %1834 = vmatprep.subr.mxu0 0.0
        %1835 = vmatpush1.msra.mxu0 0.0
        %1836 = vmatprep.subr.mxu0 0.0
        %1837 = vmatpush1.msra.mxu0 0.0
        %1838 = vmatprep.subr.mxu0 0.0
        %1839 = vmatpush1.msra.mxu0 0.0
        %1840 = vmatprep.subr.mxu0 0.0
        %1841 = vmatpush1.msra.mxu0 0.0
        %1842 = vmatprep.subr.mxu0 0.0
        %1843 = vmatpush1.msra.mxu0 0.0
        %1844 = vmatprep.subr.mxu0 0.0
        %1845 = vmatpush1.msra.mxu0 0.0
        %1846 = vmatprep.mubr.f32.mxu0 0.0
        %1847 = vmatmul.mubr.f32.gmra.mrb[0].mxu0 %v1780
        %v1848 = vpop.f32.mrb[0].mxu0
        %v1849 = vadd.f32 0.0, %v1848
        %v1850 = vpop.f32.mrb[0].mxu0
        %1851 = vdwg.mxu0
        %v1852 = vadd.f32 %v1622, %v1849
        %v1853 = vld [vmem:[%s13] sm:$0x1]
        %v1855 = vlaneseq
        %v1856 = vshrl.u32 %v1855, 7
        %v1857 = vsub.s32 0, %v1856
        %v1858 = vrot.slane %v1853, %v1857
        %v1860 = vadd.f32 %v1852, %v1858
        %1861 = vst.msk [vmem:[%s519] sm:$0xff] %vm524, %v1860
        %s1862 = sand.u32 %s346, 1
        %s1863 = scalar_lea.sflag [#allocation4], %s1862
        %s1864 = sand.u32 %s346, 1
        %s1865 = smul.addr %s1864, 8
        %s1866 = scalar_lea.vmem [#allocation7], %s1865
        // Predicated region
        $region85: #{tpu_custom_call.1} parent=75 // pred_check
          %p1867 = pneg %p356
        $region86: #{tpu_custom_call.1} parent=75 // pred_check_branch
          %1869 = sbr.rel (%p1867) target = $region88
        $region87: #{tpu_custom_call.1} parent=75 // pred_region
          %s1871 = ssub.s32 128, 128
          %1872 = vsyncadd %s1863, %s1871
          %s1873 = smul.addr %s34, 128
          %s1874 = scalar_lea.hbm %s14, %s1873
          %s1876 = sshll.u32 %s1866, 4
          %s1877 = int_to_ptr.vmem [resolvable:$true] %s1876
          %1879 = dma.vmem_to_hbm [thread:$0]  %s1877, 128, %s1874, %s1863
        $region88: #{tpu_custom_call.1} parent=75 // pred_fallthru
          _
      $region76: #{tpu_custom_call.1} parent=5 // pred_fallthru
        _
      %p1880 = scmp.le.s32.totalorder 2, %s29
      // Predicated region
      $region89: #{tpu_custom_call.1} parent=5 // pred_check
        %p1881 = pneg %p1880
      $region90: #{tpu_custom_call.1} parent=5 // pred_check_branch
        %1883 = sbr.rel (%p1881) target = $region92
      $region91: #{tpu_custom_call.1} parent=5 // pred_region
        %s1884 = ssub.s32 %s29, 2
        // Predicated region
        $region93: #{tpu_custom_call.1} parent=91 // pred_check
          %p1885 = pneg %p362
        $region94: #{tpu_custom_call.1} parent=91 // pred_check_branch
          %1887 = sbr.rel (%p1885) target = $region96
        $region95: #{tpu_custom_call.1} parent=91 // pred_region
          %s1888 = sand.u32 %s347, 1
          %s1889 = scalar_lea.sflag [#allocation4], %s1888
          %s1890 = sand.u32 %s347, 1
          %s1891 = smul.addr %s1890, 8
          %s1892 = scalar_lea.vmem [#allocation7], %s1891
          %1893 = dma.done %s1889, 128
        $region96: #{tpu_custom_call.1} parent=91 // pred_fallthru
          _
      $region92: #{tpu_custom_call.1} parent=5 // pred_fallthru
        _
    $region6: #{tpu_custom_call.1} parent=1 // loop_footer
      %s33 = sadd.s32 1, %s29
    $region7: #{tpu_custom_call.1} parent=1 // loop_footer_branch
      %28 = sbr.rel target = $region3
    $region8: #{tpu_custom_call.1} parent=1 // loop_exit
      _
    %1894 = vsyncpa [#allocation3], 1
    %s1895 = scalar_lea.sflag [#allocation3], 1
    %1896 = vsyncpa %s1895, 1
    %1897 = vsyncpa [#allocation6], 1
    %s1898 = scalar_lea.sflag [#allocation6], 1
    %1899 = vsyncpa %s1898, 1
    %1900 = vsyncpa [#allocation4], 1
    %s1901 = scalar_lea.sflag [#allocation4], 1
    %1902 = vsyncpa %s1901, 1

</llo_original>
